<compile_context>
chip_gen: v7x
topology: tpu7x:2x2x1
jax: 0.10.0
libtpu: 0.0.40
codegen_flags: <defaults>
</compile_context>

<pallas_src>
import numpy as np
import jax
import jax.numpy as jnp
from jax import lax
from jax.experimental import pallas as pl
from jax.experimental.pallas import tpu as pltpu


_G = 8  # samples fused into the matmul M dimension per grid step


def _smallest_model_kernel(x_ref, w1_ref, w2_ref, b2_ref, wfc_ref, bfc_ref, out_ref):
    G = _G
    half_k = w1_ref.shape[1] // 2          # 16*K : even-column / odd-column split

    # ---- conv1 (width-Toeplitz, 5 taps stacked along a 640-deep contraction) --
    # Output row h = 2*oh + p uses padded input rows h+di; padded row (h+di)
    # lives in the even half (rows 0..17) or odd half (rows 18..35) of x_ref at
    # half-index oh + (p+di)//2.  Rows are (oh, sample) with sample innermost.
    def conv1_relu(p):
        parts = []
        for di in range(5):
            half = 0 if (p + di) % 2 == 0 else 18
            off = (p + di) // 2
            s = (half + off) * G
            parts.append(x_ref[s:s + 16 * G, :])          # (16G, 128), 8-aligned
        lhs = jnp.concatenate(parts, axis=1)              # (16G, 640)
        return jnp.maximum(
            jnp.dot(lhs, w1_ref[...], preferred_element_type=jnp.float32), 0.0)

    # vertical 2x max (over the two output-row parities)
    hmax = jnp.maximum(conv1_relu(0), conv1_relu(1))      # (16G, 32K)
    # horizontal 2x max: even columns are lanes [0,16K), odd columns [16K,32K)
    pooled = jnp.maximum(hmax[:, :half_k], hmax[:, half_k:])   # (16G, 16K)

    # ---- conv2 VALID 5x5 over the 12x12 window (width-Toeplitz) + bias + ReLU -
    acc2 = None
    for di in range(5):
        d = jnp.dot(pooled[di * G:(di + 12) * G, :], w2_ref[di],
                    preferred_element_type=jnp.float32)   # (12G, 12*K2)
        acc2 = d if acc2 is None else acc2 + d
    a2 = jnp.maximum(acc2 + b2_ref[...], 0.0)

    # ---- global average pool (1/144 folded into fc weights) + fc --------------
    colsum = a2[:G]
    for j in range(1, 12):
        colsum = colsum + a2[j * G:(j + 1) * G, :]        # (G, 12*K2)
    out_ref[...] = (jnp.dot(colsum, wfc_ref[...],
                            preferred_element_type=jnp.float32) + bfc_ref[...])


def _prep_inputs(x, n_steps, G):
    """NCHW -> per-step (36*G, 128) rows: even padded rows then odd, sample inner."""
    N = x.shape[0]
    N_pad = n_steps * G
    xhwc = jnp.transpose(x.astype(jnp.float32), (0, 2, 3, 1))        # (N,32,32,3)
    xpad = jnp.pad(xhwc, ((0, N_pad - N), (2, 2), (2, 2), (0, 0)))   # (Np,36,36,3)
    xrow = xpad.reshape(N_pad, 36, 36 * 3)                           # lane = w*3+c
    xrow = jnp.pad(xrow, ((0, 0), (0, 0), (0, 128 - 36 * 3)))        # (Np,36,128)
    xrow = jnp.concatenate([xrow[:, 0::2, :], xrow[:, 1::2, :]], axis=1)
    xg = xrow.reshape(n_steps, G, 36, 128).transpose(0, 2, 1, 3)     # (S,36,G,128)
    return xg.reshape(n_steps, 36 * G, 128)


def _prep_weights(w1, w2, b2, wfc, bfc):
    """Build the Toeplitz / fused-GAP weight matrices (tiny, done once)."""
    K = w1.shape[0]
    K2 = w2.shape[0]
    NC = wfc.shape[0]

    # conv1: W1[di*128 + wp*3+c, lane] = w1[k, c, di, wp-w] for dj = wp-w in [0,4],
    # with output columns permuted: lane = (w%2)*16K + (w//2)*K + k.
    wp = np.arange(36)
    wo = np.arange(32)
    djm = wp[:, None] - wo[None, :]
    mask1 = jnp.asarray(((djm >= 0) & (djm <= 4)).astype(np.float32))
    dj1 = np.clip(djm, 0, 4)
    worder = np.concatenate([np.arange(0, 32, 2), np.arange(1, 32, 2)])
    b1 = jnp.transpose(w1.astype(jnp.float32), (2, 3, 1, 0))         # (5,5,3,K)
    t1 = b1[:, dj1] * mask1[None, :, :, None, None]                  # (5,36,32,3,K)
    t1 = jnp.transpose(t1, (0, 1, 3, 2, 4))[:, :, :, worder, :]      # (5,36,3,32,K)
    t1 = t1.reshape(5, 36 * 3, 32 * K)
    t1 = jnp.pad(t1, ((0, 0), (0, 128 - 36 * 3), (0, 0)))            # (5,128,32K)
    w1cat = t1.reshape(5 * 128, 32 * K)                              # (640, 32K)

    # conv2 against the compact pooled layout (lane = ow*K + k):
    # W2[di, ow*K+k, j*K2+k2] = w2[k2, k, di, ow-j] for dj = ow-j in [0,4]
    ow = np.arange(16)
    jo = np.arange(12)
    djm2 = ow[:, None] - jo[None, :]
    mask2 = jnp.asarray(((djm2 >= 0) & (djm2 <= 4)).astype(np.float32))
    dj2 = np.clip(djm2, 0, 4)
    c2 = jnp.transpose(w2.astype(jnp.float32), (2, 3, 1, 0))         # (5,5,K,K2)
    t2 = c2[:, dj2] * mask2[None, :, :, None, None]                  # (5,16,12,K,K2)
    w2t = jnp.transpose(t2, (0, 1, 3, 2, 4)).reshape(5, 16 * K, 12 * K2)

    b2row = jnp.tile(b2.astype(jnp.float32), 12).reshape(1, 12 * K2)

    # fc with the 1/144 GAP fold, zero-padded to 128 output lanes (lane-dense store)
    wfcbig = jnp.tile(wfc.T.astype(jnp.float32), (12, 1)) / 144.0    # (12K2, NC)
    wfc_pad = jnp.pad(wfcbig, ((0, 0), (0, 128 - NC)))
    bfc_pad = jnp.pad(bfc.astype(jnp.float32).reshape(1, NC), ((0, 0), (0, 128 - NC)))
    return w1cat, w2t, b2row, wfc_pad, bfc_pad


def smallest_model_forward(x, params):
    w1, w2, b2, wfc, bfc = params
    N = x.shape[0]
    K = w1.shape[0]
    K2 = w2.shape[0]
    NC = wfc.shape[0]
    G = _G

    n_steps = pl.cdiv(N, G)
    n_steps += n_steps % 2                 # even grid length -> both v7x TCs used
    N_pad = n_steps * G

    xg = _prep_inputs(x, n_steps, G)
    w1cat, w2t, b2row, wfc_pad, bfc_pad = _prep_weights(w1, w2, b2, wfc, bfc)

    flops = n_steps * (2 * 2 * (16 * G) * w1cat.shape[0] * w1cat.shape[1]
                       + 5 * 2 * (12 * G) * (16 * K) * (12 * K2)
                       + 2 * G * (12 * K2) * 128)
    bytes_accessed = 4 * (xg.size + N_pad * 128 + w1cat.size + w2t.size
                          + b2row.size + wfc_pad.size + bfc_pad.size)

    out = pl.pallas_call(
        _smallest_model_kernel,
        out_shape=jax.ShapeDtypeStruct((N_pad, 128), jnp.float32),
        grid=(n_steps,),
        in_specs=[
            pl.BlockSpec((None, 36 * G, 128), lambda n: (n, 0, 0)),  # fused inputs
            pl.BlockSpec(w1cat.shape, lambda n: (0, 0)),             # conv1 Toeplitz
            pl.BlockSpec(w2t.shape, lambda n: (0, 0, 0)),            # conv2 Toeplitz
            pl.BlockSpec(b2row.shape, lambda n: (0, 0)),             # conv2 bias
            pl.BlockSpec(wfc_pad.shape, lambda n: (0, 0)),           # fc (GAP folded)
            pl.BlockSpec(bfc_pad.shape, lambda n: (0, 0)),           # fc bias
        ],
        out_specs=pl.BlockSpec((G, 128), lambda n: (n, 0)),
        compiler_params=pltpu.CompilerParams(
            dimension_semantics=("parallel",)),
        cost_estimate=pl.CostEstimate(flops=int(flops), transcendentals=0,
                                      bytes_accessed=int(bytes_accessed)),
    )(xg, w1cat, w2t, b2row, wfc_pad, bfc_pad)
    return out[:N, :NC]


def reference_forward(x, params):
    """Pure-JAX reference of the PyTorch forward (for correctness check)."""
    w1, w2, b2, wfc, bfc = params
    hp = lax.Precision.HIGHEST
    y = lax.conv_general_dilated(x, w1, (1, 1), ((2, 2), (2, 2)),
                                 dimension_numbers=("NCHW", "OIHW", "NCHW"),
                                 precision=hp)
    y = jnp.maximum(y, 0.0)
    N, K, H, W = y.shape
    y = y.reshape(N, K, H // 2, 2, W // 2, 2).max(axis=(3, 5))
    y = lax.conv_general_dilated(y, w2, (1, 1), "VALID",
                                 dimension_numbers=("NCHW", "OIHW", "NCHW"),
                                 precision=hp)
    y = jnp.maximum(y + b2[None, :, None, None], 0.0)
    y = y.mean(axis=(2, 3))                                          # squeeze(gap)
    return jnp.dot(y, wfc.T, precision=hp) + bfc


if __name__ == "__main__":
    nkernels, nclasses, batch = 8, 10, 2   # input must be 32x32 (gap=AvgPool2d(12))
    key = jax.random.PRNGKey(0)
    kx, k1, k2, k3, k4, k5 = jax.random.split(key, 6)
    x = jax.random.normal(kx, (batch, 3, 32, 32), jnp.float32)
    params = (
        0.1 * jax.random.normal(k1, (nkernels, 3, 5, 5), jnp.float32),             # conv1.weight (bias=False)
        0.1 * jax.random.normal(k2, (nkernels // 2, nkernels, 5, 5), jnp.float32), # conv2.weight
        0.1 * jax.random.normal(k3, (nkernels // 2,), jnp.float32),                # conv2.bias
        0.1 * jax.random.normal(k4, (nclasses, nkernels // 2), jnp.float32),       # fc.weight
        0.1 * jax.random.normal(k5, (nclasses,), jnp.float32),                     # fc.bias
    )

    out = jax.block_until_ready(smallest_model_forward(x, params))
    ref = jax.block_until_ready(reference_forward(x, params))

    assert out.shape == (batch, nclasses), out.shape
    assert jnp.allclose(out, ref, atol=1e-3, rtol=1e-3), (out, ref)
    print("KERNEL_OK")
</pallas_src>

<mosaic_0001>
module attributes {stable_mosaic.version = 11 : i64} {
  func.func @_smallest_model_kernel(%arg0: i32, %arg1: memref<1x288x128xf32, #tpu.memory_space<vmem>>, %arg2: memref<640x256xf32, #tpu.memory_space<vmem>>, %arg3: memref<5x128x48xf32, #tpu.memory_space<vmem>>, %arg4: memref<1x48xf32, #tpu.memory_space<vmem>>, %arg5: memref<48x128xf32, #tpu.memory_space<vmem>>, %arg6: memref<1x128xf32, #tpu.memory_space<vmem>>, %arg7: memref<8x128xf32, #tpu.memory_space<vmem>>) attributes {dimension_semantics = [#tpu.dimension_semantics<parallel>], iteration_bounds = array<i64: 2>, scalar_prefetch = 0 : i64, scratch_operands = 0 : i64, tpu.core_type = #tpu.core_type<tc>, window_params = [{transform_indices = @transform_0, window_bounds = array<i64: 1, 288, 128>}, {pipeline_mode = #tpu.pipeline_mode<synchronous>, transform_indices = @transform_1, window_bounds = array<i64: 640, 256>}, {pipeline_mode = #tpu.pipeline_mode<synchronous>, transform_indices = @transform_2, window_bounds = array<i64: 5, 128, 48>}, {pipeline_mode = #tpu.pipeline_mode<synchronous>, transform_indices = @transform_3, window_bounds = array<i64: 1, 48>}, {pipeline_mode = #tpu.pipeline_mode<synchronous>, transform_indices = @transform_4, window_bounds = array<i64: 48, 128>}, {pipeline_mode = #tpu.pipeline_mode<synchronous>, transform_indices = @transform_5, window_bounds = array<i64: 1, 128>}, {transform_indices = @transform_6, window_bounds = array<i64: 8, 128>}]} {
    %c0 = arith.constant 0 : index
    %c0_0 = arith.constant 0 : index
    %c0_1 = arith.constant 0 : index
    %0 = vector.load %arg1[%c0, %c0_0, %c0_1] : memref<1x288x128xf32, #tpu.memory_space<vmem>>, vector<1x128x128xf32>
    %1 = vector.shape_cast %0 : vector<1x128x128xf32> to vector<128x128xf32>
    %c0_2 = arith.constant 0 : index
    %c144 = arith.constant 144 : index
    %c0_3 = arith.constant 0 : index
    %2 = vector.load %arg1[%c0_2, %c144, %c0_3] : memref<1x288x128xf32, #tpu.memory_space<vmem>>, vector<1x128x128xf32>
    %3 = vector.shape_cast %2 : vector<1x128x128xf32> to vector<128x128xf32>
    %c0_4 = arith.constant 0 : index
    %c8 = arith.constant 8 : index
    %c0_5 = arith.constant 0 : index
    %4 = vector.load %arg1[%c0_4, %c8, %c0_5] : memref<1x288x128xf32, #tpu.memory_space<vmem>>, vector<1x128x128xf32>
    %5 = vector.shape_cast %4 : vector<1x128x128xf32> to vector<128x128xf32>
    %c0_6 = arith.constant 0 : index
    %c152 = arith.constant 152 : index
    %c0_7 = arith.constant 0 : index
    %6 = vector.load %arg1[%c0_6, %c152, %c0_7] : memref<1x288x128xf32, #tpu.memory_space<vmem>>, vector<1x128x128xf32>
    %7 = vector.shape_cast %6 : vector<1x128x128xf32> to vector<128x128xf32>
    %c0_8 = arith.constant 0 : index
    %c16 = arith.constant 16 : index
    %c0_9 = arith.constant 0 : index
    %8 = vector.load %arg1[%c0_8, %c16, %c0_9] : memref<1x288x128xf32, #tpu.memory_space<vmem>>, vector<1x128x128xf32>
    %9 = vector.shape_cast %8 : vector<1x128x128xf32> to vector<128x128xf32>
    %10 = tpu.concatenate %1, %3, %5, %7, %9 in 1 : vector<128x128xf32>, vector<128x128xf32>, vector<128x128xf32>, vector<128x128xf32>, vector<128x128xf32> -> vector<128x640xf32>
    %c0_10 = arith.constant 0 : index
    %c0_11 = arith.constant 0 : index
    %11 = vector.load %arg2[%c0_10, %c0_11] : memref<640x256xf32, #tpu.memory_space<vmem>>, vector<640x256xf32>
    %cst = arith.constant dense<0.000000e+00> : vector<128x256xf32>
    %12 = tpu.matmul %10, %11, %cst {dimension_numbers = #tpu.dot_dimension_numbers<[1], [0], [0], [1], [0, 0, 1, 1], [], []>} : vector<128x640xf32>, vector<640x256xf32>, vector<128x256xf32> -> vector<128x256xf32>
    %cst_12 = arith.constant 0.000000e+00 : f32
    %13 = vector.broadcast %cst_12 : f32 to vector<128x256xf32>
    %14 = arith.maximumf %12, %13 : vector<128x256xf32>
    %c0_13 = arith.constant 0 : index
    %c144_14 = arith.constant 144 : index
    %c0_15 = arith.constant 0 : index
    %15 = vector.load %arg1[%c0_13, %c144_14, %c0_15] : memref<1x288x128xf32, #tpu.memory_space<vmem>>, vector<1x128x128xf32>
    %16 = vector.shape_cast %15 : vector<1x128x128xf32> to vector<128x128xf32>
    %c0_16 = arith.constant 0 : index
    %c8_17 = arith.constant 8 : index
    %c0_18 = arith.constant 0 : index
    %17 = vector.load %arg1[%c0_16, %c8_17, %c0_18] : memref<1x288x128xf32, #tpu.memory_space<vmem>>, vector<1x128x128xf32>
    %18 = vector.shape_cast %17 : vector<1x128x128xf32> to vector<128x128xf32>
    %c0_19 = arith.constant 0 : index
    %c152_20 = arith.constant 152 : index
    %c0_21 = arith.constant 0 : index
    %19 = vector.load %arg1[%c0_19, %c152_20, %c0_21] : memref<1x288x128xf32, #tpu.memory_space<vmem>>, vector<1x128x128xf32>
    %20 = vector.shape_cast %19 : vector<1x128x128xf32> to vector<128x128xf32>
    %c0_22 = arith.constant 0 : index
    %c16_23 = arith.constant 16 : index
    %c0_24 = arith.constant 0 : index
    %21 = vector.load %arg1[%c0_22, %c16_23, %c0_24] : memref<1x288x128xf32, #tpu.memory_space<vmem>>, vector<1x128x128xf32>
    %22 = vector.shape_cast %21 : vector<1x128x128xf32> to vector<128x128xf32>
    %c0_25 = arith.constant 0 : index
    %c160 = arith.constant 160 : index
    %c0_26 = arith.constant 0 : index
    %23 = vector.load %arg1[%c0_25, %c160, %c0_26] : memref<1x288x128xf32, #tpu.memory_space<vmem>>, vector<1x128x128xf32>
    %24 = vector.shape_cast %23 : vector<1x128x128xf32> to vector<128x128xf32>
    %25 = tpu.concatenate %16, %18, %20, %22, %24 in 1 : vector<128x128xf32>, vector<128x128xf32>, vector<128x128xf32>, vector<128x128xf32>, vector<128x128xf32> -> vector<128x640xf32>
    %c0_27 = arith.constant 0 : index
    %c0_28 = arith.constant 0 : index
    %26 = vector.load %arg2[%c0_27, %c0_28] : memref<640x256xf32, #tpu.memory_space<vmem>>, vector<640x256xf32>
    %cst_29 = arith.constant dense<0.000000e+00> : vector<128x256xf32>
    %27 = tpu.matmul %25, %26, %cst_29 {dimension_numbers = #tpu.dot_dimension_numbers<[1], [0], [0], [1], [0, 0, 1, 1], [], []>} : vector<128x640xf32>, vector<640x256xf32>, vector<128x256xf32> -> vector<128x256xf32>
    %cst_30 = arith.constant 0.000000e+00 : f32
    %28 = vector.broadcast %cst_30 : f32 to vector<128x256xf32>
    %29 = arith.maximumf %27, %28 : vector<128x256xf32>
    %30 = arith.maximumf %14, %29 : vector<128x256xf32>
    %31 = vector.extract_strided_slice %30 {offsets = [0, 0], sizes = [128, 128], strides = [1, 1]} : vector<128x256xf32> to vector<128x128xf32>
    %32 = vector.extract_strided_slice %30 {offsets = [0, 128], sizes = [128, 128], strides = [1, 1]} : vector<128x256xf32> to vector<128x128xf32>
    %33 = arith.maximumf %31, %32 : vector<128x128xf32>
    %34 = vector.extract_strided_slice %33 {offsets = [0, 0], sizes = [96, 128], strides = [1, 1]} : vector<128x128xf32> to vector<96x128xf32>
    %c0_31 = arith.constant 0 : index
    %c0_32 = arith.constant 0 : index
    %c0_33 = arith.constant 0 : index
    %35 = vector.load %arg3[%c0_31, %c0_32, %c0_33] : memref<5x128x48xf32, #tpu.memory_space<vmem>>, vector<1x128x48xf32>
    %36 = vector.shape_cast %35 : vector<1x128x48xf32> to vector<128x48xf32>
    %cst_34 = arith.constant dense<0.000000e+00> : vector<96x48xf32>
    %37 = tpu.matmul %34, %36, %cst_34 {dimension_numbers = #tpu.dot_dimension_numbers<[1], [0], [0], [1], [0, 0, 1, 1], [], []>} : vector<96x128xf32>, vector<128x48xf32>, vector<96x48xf32> -> vector<96x48xf32>
    %38 = vector.extract_strided_slice %33 {offsets = [8, 0], sizes = [96, 128], strides = [1, 1]} : vector<128x128xf32> to vector<96x128xf32>
    %c1 = arith.constant 1 : index
    %c0_35 = arith.constant 0 : index
    %c0_36 = arith.constant 0 : index
    %39 = vector.load %arg3[%c1, %c0_35, %c0_36] : memref<5x128x48xf32, #tpu.memory_space<vmem>>, vector<1x128x48xf32>
    %40 = vector.shape_cast %39 : vector<1x128x48xf32> to vector<128x48xf32>
    %cst_37 = arith.constant dense<0.000000e+00> : vector<96x48xf32>
    %41 = tpu.matmul %38, %40, %cst_37 {dimension_numbers = #tpu.dot_dimension_numbers<[1], [0], [0], [1], [0, 0, 1, 1], [], []>} : vector<96x128xf32>, vector<128x48xf32>, vector<96x48xf32> -> vector<96x48xf32>
    %42 = arith.addf %37, %41 : vector<96x48xf32>
    %43 = vector.extract_strided_slice %33 {offsets = [16, 0], sizes = [96, 128], strides = [1, 1]} : vector<128x128xf32> to vector<96x128xf32>
    %c2 = arith.constant 2 : index
    %c0_38 = arith.constant 0 : index
    %c0_39 = arith.constant 0 : index
    %44 = vector.load %arg3[%c2, %c0_38, %c0_39] : memref<5x128x48xf32, #tpu.memory_space<vmem>>, vector<1x128x48xf32>
    %45 = vector.shape_cast %44 : vector<1x128x48xf32> to vector<128x48xf32>
    %cst_40 = arith.constant dense<0.000000e+00> : vector<96x48xf32>
    %46 = tpu.matmul %43, %45, %cst_40 {dimension_numbers = #tpu.dot_dimension_numbers<[1], [0], [0], [1], [0, 0, 1, 1], [], []>} : vector<96x128xf32>, vector<128x48xf32>, vector<96x48xf32> -> vector<96x48xf32>
    %47 = arith.addf %42, %46 : vector<96x48xf32>
    %48 = vector.extract_strided_slice %33 {offsets = [24, 0], sizes = [96, 128], strides = [1, 1]} : vector<128x128xf32> to vector<96x128xf32>
    %c3 = arith.constant 3 : index
    %c0_41 = arith.constant 0 : index
    %c0_42 = arith.constant 0 : index
    %49 = vector.load %arg3[%c3, %c0_41, %c0_42] : memref<5x128x48xf32, #tpu.memory_space<vmem>>, vector<1x128x48xf32>
    %50 = vector.shape_cast %49 : vector<1x128x48xf32> to vector<128x48xf32>
    %cst_43 = arith.constant dense<0.000000e+00> : vector<96x48xf32>
    %51 = tpu.matmul %48, %50, %cst_43 {dimension_numbers = #tpu.dot_dimension_numbers<[1], [0], [0], [1], [0, 0, 1, 1], [], []>} : vector<96x128xf32>, vector<128x48xf32>, vector<96x48xf32> -> vector<96x48xf32>
    %52 = arith.addf %47, %51 : vector<96x48xf32>
    %53 = vector.extract_strided_slice %33 {offsets = [32, 0], sizes = [96, 128], strides = [1, 1]} : vector<128x128xf32> to vector<96x128xf32>
    %c4 = arith.constant 4 : index
    %c0_44 = arith.constant 0 : index
    %c0_45 = arith.constant 0 : index
    %54 = vector.load %arg3[%c4, %c0_44, %c0_45] : memref<5x128x48xf32, #tpu.memory_space<vmem>>, vector<1x128x48xf32>
    %55 = vector.shape_cast %54 : vector<1x128x48xf32> to vector<128x48xf32>
    %cst_46 = arith.constant dense<0.000000e+00> : vector<96x48xf32>
    %56 = tpu.matmul %53, %55, %cst_46 {dimension_numbers = #tpu.dot_dimension_numbers<[1], [0], [0], [1], [0, 0, 1, 1], [], []>} : vector<96x128xf32>, vector<128x48xf32>, vector<96x48xf32> -> vector<96x48xf32>
    %57 = arith.addf %52, %56 : vector<96x48xf32>
    %c0_47 = arith.constant 0 : index
    %c0_48 = arith.constant 0 : index
    %58 = vector.load %arg4[%c0_47, %c0_48] : memref<1x48xf32, #tpu.memory_space<vmem>>, vector<1x48xf32>
    %59 = vector.broadcast %58 : vector<1x48xf32> to vector<96x48xf32>
    %60 = arith.addf %57, %59 : vector<96x48xf32>
    %cst_49 = arith.constant 0.000000e+00 : f32
    %61 = vector.broadcast %cst_49 : f32 to vector<96x48xf32>
    %62 = arith.maximumf %60, %61 : vector<96x48xf32>
    %63 = vector.extract_strided_slice %62 {offsets = [0, 0], sizes = [8, 48], strides = [1, 1]} : vector<96x48xf32> to vector<8x48xf32>
    %64 = vector.extract_strided_slice %62 {offsets = [8, 0], sizes = [8, 48], strides = [1, 1]} : vector<96x48xf32> to vector<8x48xf32>
    %65 = arith.addf %63, %64 : vector<8x48xf32>
    %66 = vector.extract_strided_slice %62 {offsets = [16, 0], sizes = [8, 48], strides = [1, 1]} : vector<96x48xf32> to vector<8x48xf32>
    %67 = arith.addf %65, %66 : vector<8x48xf32>
    %68 = vector.extract_strided_slice %62 {offsets = [24, 0], sizes = [8, 48], strides = [1, 1]} : vector<96x48xf32> to vector<8x48xf32>
    %69 = arith.addf %67, %68 : vector<8x48xf32>
    %70 = vector.extract_strided_slice %62 {offsets = [32, 0], sizes = [8, 48], strides = [1, 1]} : vector<96x48xf32> to vector<8x48xf32>
    %71 = arith.addf %69, %70 : vector<8x48xf32>
    %72 = vector.extract_strided_slice %62 {offsets = [40, 0], sizes = [8, 48], strides = [1, 1]} : vector<96x48xf32> to vector<8x48xf32>
    %73 = arith.addf %71, %72 : vector<8x48xf32>
    %74 = vector.extract_strided_slice %62 {offsets = [48, 0], sizes = [8, 48], strides = [1, 1]} : vector<96x48xf32> to vector<8x48xf32>
    %75 = arith.addf %73, %74 : vector<8x48xf32>
    %76 = vector.extract_strided_slice %62 {offsets = [56, 0], sizes = [8, 48], strides = [1, 1]} : vector<96x48xf32> to vector<8x48xf32>
    %77 = arith.addf %75, %76 : vector<8x48xf32>
    %78 = vector.extract_strided_slice %62 {offsets = [64, 0], sizes = [8, 48], strides = [1, 1]} : vector<96x48xf32> to vector<8x48xf32>
    %79 = arith.addf %77, %78 : vector<8x48xf32>
    %80 = vector.extract_strided_slice %62 {offsets = [72, 0], sizes = [8, 48], strides = [1, 1]} : vector<96x48xf32> to vector<8x48xf32>
    %81 = arith.addf %79, %80 : vector<8x48xf32>
    %82 = vector.extract_strided_slice %62 {offsets = [80, 0], sizes = [8, 48], strides = [1, 1]} : vector<96x48xf32> to vector<8x48xf32>
    %83 = arith.addf %81, %82 : vector<8x48xf32>
    %84 = vector.extract_strided_slice %62 {offsets = [88, 0], sizes = [8, 48], strides = [1, 1]} : vector<96x48xf32> to vector<8x48xf32>
    %85 = arith.addf %83, %84 : vector<8x48xf32>
    %c0_50 = arith.constant 0 : index
    %c0_51 = arith.constant 0 : index
    %86 = vector.load %arg5[%c0_50, %c0_51] : memref<48x128xf32, #tpu.memory_space<vmem>>, vector<48x128xf32>
    %cst_52 = arith.constant dense<0.000000e+00> : vector<8x128xf32>
    %87 = tpu.matmul %85, %86, %cst_52 {dimension_numbers = #tpu.dot_dimension_numbers<[1], [0], [0], [1], [0, 0, 1, 1], [], []>} : vector<8x48xf32>, vector<48x128xf32>, vector<8x128xf32> -> vector<8x128xf32>
    %c0_53 = arith.constant 0 : index
    %c0_54 = arith.constant 0 : index
    %88 = vector.load %arg6[%c0_53, %c0_54] : memref<1x128xf32, #tpu.memory_space<vmem>>, vector<1x128xf32>
    %89 = vector.broadcast %88 : vector<1x128xf32> to vector<8x128xf32>
    %90 = arith.addf %87, %89 : vector<8x128xf32>
    %c0_55 = arith.constant 0 : index
    %c0_56 = arith.constant 0 : index
    %91 = vector.load %arg7[%c0_55, %c0_56] : memref<8x128xf32, #tpu.memory_space<vmem>>, vector<8x128xf32>
    tpu.vector_store %arg7[%c0_55, %c0_56], %90 {strides = array<i32>} : memref<8x128xf32, #tpu.memory_space<vmem>>, vector<8x128xf32>,
    return
  }
  func.func @transform_0(%arg0: i32) -> (i32, i32, i32) {
    %c0_i32 = arith.constant 0 : i32
    %c0_i32_0 = arith.constant 0 : i32
    %c0_i32_1 = arith.constant 0 : i32
    return %arg0, %c0_i32, %c0_i32_0 : i32, i32, i32
  }
  func.func @transform_1(%arg0: i32) -> (i32, i32) {
    %c0_i32 = arith.constant 0 : i32
    %c0_i32_0 = arith.constant 0 : i32
    %c0_i32_1 = arith.constant 0 : i32
    return %c0_i32, %c0_i32_0 : i32, i32
  }
  func.func @transform_2(%arg0: i32) -> (i32, i32, i32) {
    %c0_i32 = arith.constant 0 : i32
    %c0_i32_0 = arith.constant 0 : i32
    %c0_i32_1 = arith.constant 0 : i32
    %c0_i32_2 = arith.constant 0 : i32
    return %c0_i32, %c0_i32_0, %c0_i32_1 : i32, i32, i32
  }
  func.func @transform_3(%arg0: i32) -> (i32, i32) {
    %c0_i32 = arith.constant 0 : i32
    %c0_i32_0 = arith.constant 0 : i32
    %c0_i32_1 = arith.constant 0 : i32
    return %c0_i32, %c0_i32_0 : i32, i32
  }
  func.func @transform_4(%arg0: i32) -> (i32, i32) {
    %c0_i32 = arith.constant 0 : i32
    %c0_i32_0 = arith.constant 0 : i32
    %c0_i32_1 = arith.constant 0 : i32
    return %c0_i32, %c0_i32_0 : i32, i32
  }
  func.func @transform_5(%arg0: i32) -> (i32, i32) {
    %c0_i32 = arith.constant 0 : i32
    %c0_i32_0 = arith.constant 0 : i32
    %c0_i32_1 = arith.constant 0 : i32
    return %c0_i32, %c0_i32_0 : i32, i32
  }
  func.func @transform_6(%arg0: i32) -> (i32, i32) {
    %c0_i32 = arith.constant 0 : i32
    %c0_i32_0 = arith.constant 0 : i32
    return %arg0, %c0_i32 : i32, i32
  }
}

</mosaic_0001>

<llo_original>
// kernel: tpu_custom_call.1
$region0: #{tpu_custom_call.1}
  #allocation0 [shape = 'u32[]', space=smem, size = 0x4, offset = 0x4, fixed_abs, tag = 'smem constant byte address 0x4 - core index']
  #allocation1 [shape = 'u32[144,128]{1,0:T(1,128)}', space=vmem, size = 0x12000, scoped, tag = 'internal scratch']
  %s0 = inlined_call_operand.vmem [shape: f32[2,288,128], index: 0, kind: input, shape index: {}]
  %s1 = inlined_call_operand.hbm [shape: f32[640,256], index: 1, kind: input, shape index: {}]
  %s2 = inlined_call_operand.vmem [shape: f32[5,128,48], index: 2, kind: input, shape index: {}]
  %s3 = inlined_call_operand.vmem [shape: f32[1,48], index: 3, kind: input, shape index: {}]
  %s4 = inlined_call_operand.vmem [shape: f32[48,128], index: 4, kind: input, shape index: {}]
  %s5 = inlined_call_operand.vmem [shape: f32[1,128], index: 5, kind: input, shape index: {}]
  %s6 = inlined_call_operand.hbm [shape: f32[16,128], index: 6, kind: output, shape index: {}]
  %s7 = sld [smem:[#allocation0]]
  $region61: #{tpu_custom_call.1} parent=0
    _
  %s9 = ssub.s32 1, %s7
  %s10 = scalar_select 0, %s9, %s7
  $region1: #{tpu_custom_call.1} parent=0
    #allocation2 [shape = 'u8[655360]{0}', space=vmem, size = 0xa0000, scoped, tag = 'input window, operand 1, single buffered']
    #allocation3 [shape = 's32[2]{0}', space=sflag, size = 0x8, scoped, tag = 'scoped memory for tpu_custom_call.1']
    #allocation4 [shape = 's32[2]{0}', space=sflag, size = 0x8, scoped, tag = 'scoped memory for tpu_custom_call.1']
    #allocation5 [shape = 'u8[8192]{0}', space=vmem, size = 0x2000, scoped, tag = 'output window, operand 0']
    %11 = vsyncpa [#allocation3], 0
    %12 = vsyncpa [#allocation4], 0
    %s13 = scalar_lea.sflag [#allocation4], 1
    %14 = vsyncpa %s13, 0
    loop: start=0, step=1, limit=4
    $region2: #{tpu_custom_call.1} parent=1 // loop_pre_header
      _
    $region3: #{tpu_custom_call.1} parent=1 // loop_header
      %s16 = sphi 0, %s20
      %p17 = scmp.ge.s32.totalorder %s16, 4
      %s26 = sphi 0, %s28
      %s29 = sphi 0, %s26
      %s30 = sphi 0, %s29
      %s46 = sphi 0, %s30
      %s50 = sphi 0, %s50
      %s52 = sphi 0, %s50
      %s53 = sphi 0, %s52
      %s67 = sphi 0, %s53
      %s71 = sphi 0, %s71
      %s73 = sphi 0, %s71
      %s74 = sphi 0, %s73
      %s88 = sphi 0, %s74
      %s92 = sphi 0, %s92
      %s94 = sphi 0, %s92
      %s95 = sphi 0, %s94
      %s109 = sphi 0, %s95
      %s113 = sphi 0, %s113
      %s115 = sphi 0, %s113
      %s116 = sphi 0, %s115
      %s130 = sphi 0, %s116
      %s134 = sphi 0, %s134
      %s136 = sphi 0, %s134
      %s137 = sphi 0, %s136
      %s151 = sphi 0, %s137
      %s157 = sphi 0, %s159
      %s160 = sphi 0, %s157
      %s161 = sphi 0, %s160
      %s177 = sphi 0, %s161
    $region4: #{tpu_custom_call.1} parent=1 // loop_header_branch
      %19 = sbr.rel (%p17) target = $region8
    $region5: #{tpu_custom_call.1} parent=1 // loop_body
      %s21 = ssub.s32 %s16, 1
      %s22 = ssub.s32 %s16, 2
      %s23 = sadd.s32 %s16, 1
      %s24 = ssub.s32 %s16, %s23
      %p25 = scmp.eq.s32.totalorder %s24, 0
      %s27 = sadd.s32 %s26, 1
      %s28 = scalar_select %p25, %s26, %s27
      %p31 = pneg %p25
      %p32 = scmp.eq.s32.totalorder %s16, 1
      %p33 = por %p31, %p32
      %p34 = scmp.ne.s32.totalorder %s26, %s29
      %p35 = scmp.eq.s32.totalorder %s16, 0
      %p36 = por %p34, %p35
      %p37 = scmp.ne.s32.totalorder %s26, %s29
      %p38 = scmp.eq.s32.totalorder %s21, 1
      %p39 = por %p37, %p38
      %p40 = scmp.ne.s32.totalorder %s29, %s30
      %p41 = scmp.eq.s32.totalorder %s21, 0
      %p42 = por %p40, %p41
      %p43 = scmp.ne.s32.totalorder %s29, %s30
      %p44 = scmp.eq.s32.totalorder %s22, 1
      %p45 = por %p43, %p44
      %p47 = scmp.ne.s32.totalorder %s30, %s46
      %p48 = scmp.eq.s32.totalorder %s22, 0
      %p49 = por %p47, %p48
      %s51 = sadd.s32 %s50, 1
      %p54 = scmp.eq.s32.totalorder %s16, 1
      %p55 = scmp.ne.s32.totalorder %s50, %s52
      %p56 = scmp.eq.s32.totalorder %s16, 0
      %p57 = por %p55, %p56
      %p58 = scmp.ne.s32.totalorder %s50, %s52
      %p59 = scmp.eq.s32.totalorder %s21, 1
      %p60 = por %p58, %p59
      %p61 = scmp.ne.s32.totalorder %s52, %s53
      %p62 = scmp.eq.s32.totalorder %s21, 0
      %p63 = por %p61, %p62
      %p64 = scmp.ne.s32.totalorder %s52, %s53
      %p65 = scmp.eq.s32.totalorder %s22, 1
      %p66 = por %p64, %p65
      %p68 = scmp.ne.s32.totalorder %s53, %s67
      %p69 = scmp.eq.s32.totalorder %s22, 0
      %p70 = por %p68, %p69
      %s72 = sadd.s32 %s71, 1
      %p75 = scmp.eq.s32.totalorder %s16, 1
      %p76 = scmp.ne.s32.totalorder %s71, %s73
      %p77 = scmp.eq.s32.totalorder %s16, 0
      %p78 = por %p76, %p77
      %p79 = scmp.ne.s32.totalorder %s71, %s73
      %p80 = scmp.eq.s32.totalorder %s21, 1
      %p81 = por %p79, %p80
      %p82 = scmp.ne.s32.totalorder %s73, %s74
      %p83 = scmp.eq.s32.totalorder %s21, 0
      %p84 = por %p82, %p83
      %p85 = scmp.ne.s32.totalorder %s73, %s74
      %p86 = scmp.eq.s32.totalorder %s22, 1
      %p87 = por %p85, %p86
      %p89 = scmp.ne.s32.totalorder %s74, %s88
      %p90 = scmp.eq.s32.totalorder %s22, 0
      %p91 = por %p89, %p90
      %s93 = sadd.s32 %s92, 1
      %p96 = scmp.eq.s32.totalorder %s16, 1
      %p97 = scmp.ne.s32.totalorder %s92, %s94
      %p98 = scmp.eq.s32.totalorder %s16, 0
      %p99 = por %p97, %p98
      %p100 = scmp.ne.s32.totalorder %s92, %s94
      %p101 = scmp.eq.s32.totalorder %s21, 1
      %p102 = por %p100, %p101
      %p103 = scmp.ne.s32.totalorder %s94, %s95
      %p104 = scmp.eq.s32.totalorder %s21, 0
      %p105 = por %p103, %p104
      %p106 = scmp.ne.s32.totalorder %s94, %s95
      %p107 = scmp.eq.s32.totalorder %s22, 1
      %p108 = por %p106, %p107
      %p110 = scmp.ne.s32.totalorder %s95, %s109
      %p111 = scmp.eq.s32.totalorder %s22, 0
      %p112 = por %p110, %p111
      %s114 = sadd.s32 %s113, 1
      %p117 = scmp.eq.s32.totalorder %s16, 1
      %p118 = scmp.ne.s32.totalorder %s113, %s115
      %p119 = scmp.eq.s32.totalorder %s16, 0
      %p120 = por %p118, %p119
      %p121 = scmp.ne.s32.totalorder %s113, %s115
      %p122 = scmp.eq.s32.totalorder %s21, 1
      %p123 = por %p121, %p122
      %p124 = scmp.ne.s32.totalorder %s115, %s116
      %p125 = scmp.eq.s32.totalorder %s21, 0
      %p126 = por %p124, %p125
      %p127 = scmp.ne.s32.totalorder %s115, %s116
      %p128 = scmp.eq.s32.totalorder %s22, 1
      %p129 = por %p127, %p128
      %p131 = scmp.ne.s32.totalorder %s116, %s130
      %p132 = scmp.eq.s32.totalorder %s22, 0
      %p133 = por %p131, %p132
      %s135 = sadd.s32 %s134, 1
      %p138 = scmp.eq.s32.totalorder %s16, 1
      %p139 = scmp.ne.s32.totalorder %s134, %s136
      %p140 = scmp.eq.s32.totalorder %s16, 0
      %p141 = por %p139, %p140
      %p142 = scmp.ne.s32.totalorder %s134, %s136
      %p143 = scmp.eq.s32.totalorder %s21, 1
      %p144 = por %p142, %p143
      %p145 = scmp.ne.s32.totalorder %s136, %s137
      %p146 = scmp.eq.s32.totalorder %s21, 0
      %p147 = por %p145, %p146
      %p148 = scmp.ne.s32.totalorder %s136, %s137
      %p149 = scmp.eq.s32.totalorder %s22, 1
      %p150 = por %p148, %p149
      %p152 = scmp.ne.s32.totalorder %s137, %s151
      %p153 = scmp.eq.s32.totalorder %s22, 0
      %p154 = por %p152, %p153
      %s155 = ssub.s32 %s16, %s23
      %p156 = scmp.eq.s32.totalorder %s155, 0
      %s158 = sadd.s32 %s157, 1
      %s159 = scalar_select %p156, %s157, %s158
      %p162 = pneg %p156
      %p163 = scmp.eq.s32.totalorder %s16, 1
      %p164 = por %p162, %p163
      %p165 = scmp.ne.s32.totalorder %s157, %s160
      %p166 = scmp.eq.s32.totalorder %s16, 0
      %p167 = por %p165, %p166
      %p168 = scmp.ne.s32.totalorder %s157, %s160
      %p169 = scmp.eq.s32.totalorder %s21, 1
      %p170 = por %p168, %p169
      %p171 = scmp.ne.s32.totalorder %s160, %s161
      %p172 = scmp.eq.s32.totalorder %s21, 0
      %p173 = por %p171, %p172
      %p174 = scmp.ne.s32.totalorder %s160, %s161
      %p175 = scmp.eq.s32.totalorder %s22, 1
      %p176 = por %p174, %p175
      %p178 = scmp.ne.s32.totalorder %s161, %s177
      %p179 = scmp.eq.s32.totalorder %s22, 0
      %p180 = por %p178, %p179
      %p181 = scmp.le.s32.totalorder 1, %s16
      %p182 = scmp.lt.s32.totalorder %s16, 3
      %p183 = pnand %p181, %p182
      %p184 = pneg %p183
      // Predicated region
      $region9: #{tpu_custom_call.1} parent=5 // pred_check
        _
      $region10: #{tpu_custom_call.1} parent=5 // pred_check_branch
        %186 = sbr.rel (%p183) target = $region12
      $region11: #{tpu_custom_call.1} parent=5 // pred_region
        %s187 = ssub.s32 %s16, 1
        // Predicated region
        $region13: #{tpu_custom_call.1} parent=11 // pred_check
          %p188 = pneg %p63
        $region14: #{tpu_custom_call.1} parent=11 // pred_check_branch
          %190 = sbr.rel (%p188) target = $region16
        $region15: #{tpu_custom_call.1} parent=11 // pred_region
          %s192 = ssub.s32 20480, 20480
          %193 = vsyncadd [#allocation3], %s192
          %s194 = sshll.u32 [#allocation2], 4
          %s195 = int_to_ptr.vmem [resolvable:$true] %s194
          %200 = dma.hbm_to_vmem [thread:$0]  %s1, 20480, %s195, [#allocation3], 256, 256, 16
        $region16: #{tpu_custom_call.1} parent=11 // pred_fallthru
          _
        // Predicated region
        $region17: #{tpu_custom_call.1} parent=11 // pred_check
          %p201 = pneg %p84
        $region18: #{tpu_custom_call.1} parent=11 // pred_check_branch
          %203 = sbr.rel (%p201) target = $region20
        $region19: #{tpu_custom_call.1} parent=11 // pred_region
          _
        $region20: #{tpu_custom_call.1} parent=11 // pred_fallthru
          _
        // Predicated region
        $region21: #{tpu_custom_call.1} parent=11 // pred_check
          %p204 = pneg %p105
        $region22: #{tpu_custom_call.1} parent=11 // pred_check_branch
          %206 = sbr.rel (%p204) target = $region24
        $region23: #{tpu_custom_call.1} parent=11 // pred_region
          _
        $region24: #{tpu_custom_call.1} parent=11 // pred_fallthru
          _
        // Predicated region
        $region25: #{tpu_custom_call.1} parent=11 // pred_check
          %p207 = pneg %p126
        $region26: #{tpu_custom_call.1} parent=11 // pred_check_branch
          %209 = sbr.rel (%p207) target = $region28
        $region27: #{tpu_custom_call.1} parent=11 // pred_region
          _
        $region28: #{tpu_custom_call.1} parent=11 // pred_fallthru
          _
        // Predicated region
        $region29: #{tpu_custom_call.1} parent=11 // pred_check
          %p210 = pneg %p147
        $region30: #{tpu_custom_call.1} parent=11 // pred_check_branch
          %212 = sbr.rel (%p210) target = $region32
        $region31: #{tpu_custom_call.1} parent=11 // pred_region
          _
        $region32: #{tpu_custom_call.1} parent=11 // pred_fallthru
          _
      $region12: #{tpu_custom_call.1} parent=5 // pred_fallthru
        _
      %p213 = scmp.lt.s32.totalorder %s16, 2
      // Predicated region
      $region33: #{tpu_custom_call.1} parent=5 // pred_check
        %p214 = pneg %p213
      $region34: #{tpu_custom_call.1} parent=5 // pred_check_branch
        %216 = sbr.rel (%p214) target = $region36
      $region35: #{tpu_custom_call.1} parent=5 // pred_region
        // Predicated region
        $region37: #{tpu_custom_call.1} parent=35 // pred_check
          %p217 = pneg %p36
        $region38: #{tpu_custom_call.1} parent=35 // pred_check_branch
          %219 = sbr.rel (%p217) target = $region40
        $region39: #{tpu_custom_call.1} parent=35 // pred_region
          %p220 = scmp.lt.s32.totalorder %s16, 1
          %s221 = scalar_select %p220, %s16, 1
          %s222 = smul.addr %s221, 36
          %s223 = smul.addr %s222, 8
          %s224 = scalar_lea.vmem %s0, %s223
        $region40: #{tpu_custom_call.1} parent=35 // pred_fallthru
          _
      $region36: #{tpu_custom_call.1} parent=5 // pred_fallthru
        _
      %p225 = scmp.le.s32.totalorder 1, %s16
      %p226 = scmp.lt.s32.totalorder %s16, 3
      %p227 = pnand %p225, %p226
      %p228 = pneg %p227
      // Predicated region
      $region41: #{tpu_custom_call.1} parent=5 // pred_check
        _
      $region42: #{tpu_custom_call.1} parent=5 // pred_check_branch
        %230 = sbr.rel (%p227) target = $region44
      $region43: #{tpu_custom_call.1} parent=5 // pred_region
        %s231 = ssub.s32 %s16, 1
        // Predicated region
        $region45: #{tpu_custom_call.1} parent=43 // pred_check
          %p232 = pneg %p63
        $region46: #{tpu_custom_call.1} parent=43 // pred_check_branch
          %234 = sbr.rel (%p232) target = $region48
        $region47: #{tpu_custom_call.1} parent=43 // pred_region
          %235 = dma.done [#allocation3], 20480
        $region48: #{tpu_custom_call.1} parent=43 // pred_fallthru
          _
        %p236 = scmp.lt.s32.totalorder %s21, 1
        %s237 = scalar_select %p236, %s21, 1
        %s238 = smul.addr %s237, 36
        %s239 = smul.addr %s238, 8
        %s240 = scalar_lea.vmem %s0, %s239
        %p241 = pneg %p42
        %p242 = pneg %p39
        %p243 = pneg %p63
        %p244 = pneg %p60
        %p245 = pneg %p84
        %p246 = pneg %p81
        %p247 = pneg %p105
        %p248 = pneg %p102
        %p249 = pneg %p126
        %p250 = pneg %p123
        %p251 = pneg %p147
        %p252 = pneg %p144
        %p253 = pneg %p173
        %p254 = pneg %p170
        %s255 = sand.u32 %s160, 1
        %s256 = scalar_lea.sflag [#allocation4], %s255
        %s257 = sand.u32 %s160, 1
        %s258 = smul.addr %s257, 8
        %s259 = scalar_lea.vmem [#allocation5], %s258
        %p260 = scmp.lt.s32.totalorder %s21, 1
        %s261 = scalar_select %p260, %s21, 1
        %s262 = smul.addr %s261, 36
        %s263 = smul.addr %s262, 8
        %s264 = scalar_lea.vmem %s0, %s263
        %v265 = vld [vmem:[%s264] sm:$0xff]
        %v266 = vld [vmem:[%s264 + $0x8] sm:$0xff]
        %v267 = vld [vmem:[%s264 + $0x10] sm:$0xff]
        %v268 = vld [vmem:[%s264 + $0x18] sm:$0xff]
        %v269 = vld [vmem:[%s264 + $0x20] sm:$0xff]
        %v270 = vld [vmem:[%s264 + $0x28] sm:$0xff]
        %v271 = vld [vmem:[%s264 + $0x30] sm:$0xff]
        %v272 = vld [vmem:[%s264 + $0x38] sm:$0xff]
        %v273 = vld [vmem:[%s264 + $0x40] sm:$0xff]
        %v274 = vld [vmem:[%s264 + $0x48] sm:$0xff]
        %v275 = vld [vmem:[%s264 + $0x50] sm:$0xff]
        %v276 = vld [vmem:[%s264 + $0x58] sm:$0xff]
        %v277 = vld [vmem:[%s264 + $0x60] sm:$0xff]
        %v278 = vld [vmem:[%s264 + $0x68] sm:$0xff]
        %v279 = vld [vmem:[%s264 + $0x70] sm:$0xff]
        %v280 = vld [vmem:[%s264 + $0x78] sm:$0xff]
        %v281 = vld [vmem:[%s264 + $0x90] sm:$0xff]
        %v282 = vld [vmem:[%s264 + $0x98] sm:$0xff]
        %v283 = vld [vmem:[%s264 + $0xa0] sm:$0xff]
        %v284 = vld [vmem:[%s264 + $0xa8] sm:$0xff]
        %v285 = vld [vmem:[%s264 + $0xb0] sm:$0xff]
        %v286 = vld [vmem:[%s264 + $0xb8] sm:$0xff]
        %v287 = vld [vmem:[%s264 + $0xc0] sm:$0xff]
        %v288 = vld [vmem:[%s264 + $0xc8] sm:$0xff]
        %v289 = vld [vmem:[%s264 + $0xd0] sm:$0xff]
        %v290 = vld [vmem:[%s264 + $0xd8] sm:$0xff]
        %v291 = vld [vmem:[%s264 + $0xe0] sm:$0xff]
        %v292 = vld [vmem:[%s264 + $0xe8] sm:$0xff]
        %v293 = vld [vmem:[%s264 + $0xf0] sm:$0xff]
        %v294 = vld [vmem:[%s264 + $0xf8] sm:$0xff]
        %v295 = vld [vmem:[%s264 + $0x100] sm:$0xff]
        %v296 = vld [vmem:[%s264 + $0x108] sm:$0xff]
        %v297 = vld [vmem:[%s264 + $0x80] sm:$0xff]
        %v298 = vld [vmem:[%s264 + $0x110] sm:$0xff]
        %v299 = vld [vmem:[%s264 + $0x88] sm:$0xff]
        %v300 = vld [vmem:[#allocation2] sm:$0xff]
        %v301 = vld [vmem:[#allocation2 + $0x8] sm:$0xff]
        %v302 = vld [vmem:[#allocation2 + $0x10] sm:$0xff]
        %v303 = vld [vmem:[#allocation2 + $0x18] sm:$0xff]
        %v304 = vld [vmem:[#allocation2 + $0x20] sm:$0xff]
        %v305 = vld [vmem:[#allocation2 + $0x28] sm:$0xff]
        %v306 = vld [vmem:[#allocation2 + $0x30] sm:$0xff]
        %v307 = vld [vmem:[#allocation2 + $0x38] sm:$0xff]
        %v308 = vld [vmem:[#allocation2 + $0x40] sm:$0xff]
        %v309 = vld [vmem:[#allocation2 + $0x48] sm:$0xff]
        %v310 = vld [vmem:[#allocation2 + $0x50] sm:$0xff]
        %v311 = vld [vmem:[#allocation2 + $0x58] sm:$0xff]
        %v312 = vld [vmem:[#allocation2 + $0x60] sm:$0xff]
        %v313 = vld [vmem:[#allocation2 + $0x68] sm:$0xff]
        %v314 = vld [vmem:[#allocation2 + $0x70] sm:$0xff]
        %v315 = vld [vmem:[#allocation2 + $0x78] sm:$0xff]
        %v316 = vld [vmem:[#allocation2 + $0x80] sm:$0xff]
        %v317 = vld [vmem:[#allocation2 + $0x88] sm:$0xff]
        %v318 = vld [vmem:[#allocation2 + $0x90] sm:$0xff]
        %v319 = vld [vmem:[#allocation2 + $0x98] sm:$0xff]
        %v320 = vld [vmem:[#allocation2 + $0xa0] sm:$0xff]
        %v321 = vld [vmem:[#allocation2 + $0xa8] sm:$0xff]
        %v322 = vld [vmem:[#allocation2 + $0xb0] sm:$0xff]
        %v323 = vld [vmem:[#allocation2 + $0xb8] sm:$0xff]
        %v324 = vld [vmem:[#allocation2 + $0xc0] sm:$0xff]
        %v325 = vld [vmem:[#allocation2 + $0xc8] sm:$0xff]
        %v326 = vld [vmem:[#allocation2 + $0xd0] sm:$0xff]
        %v327 = vld [vmem:[#allocation2 + $0xd8] sm:$0xff]
        %v328 = vld [vmem:[#allocation2 + $0xe0] sm:$0xff]
        %v329 = vld [vmem:[#allocation2 + $0xe8] sm:$0xff]
        %v330 = vld [vmem:[#allocation2 + $0xf0] sm:$0xff]
        %v331 = vld [vmem:[#allocation2 + $0xf8] sm:$0xff]
        %v332 = vld [vmem:[#allocation2 + $0x100] sm:$0xff]
        %v333 = vld [vmem:[#allocation2 + $0x108] sm:$0xff]
        %v334 = vld [vmem:[#allocation2 + $0x110] sm:$0xff]
        %v335 = vld [vmem:[#allocation2 + $0x118] sm:$0xff]
        %v336 = vld [vmem:[#allocation2 + $0x120] sm:$0xff]
        %v337 = vld [vmem:[#allocation2 + $0x128] sm:$0xff]
        %v338 = vld [vmem:[#allocation2 + $0x130] sm:$0xff]
        %v339 = vld [vmem:[#allocation2 + $0x138] sm:$0xff]
        %v340 = vld [vmem:[#allocation2 + $0x140] sm:$0xff]
        %v341 = vld [vmem:[#allocation2 + $0x148] sm:$0xff]
        %v342 = vld [vmem:[#allocation2 + $0x150] sm:$0xff]
        %v343 = vld [vmem:[#allocation2 + $0x158] sm:$0xff]
        %v344 = vld [vmem:[#allocation2 + $0x160] sm:$0xff]
        %v345 = vld [vmem:[#allocation2 + $0x168] sm:$0xff]
        %v346 = vld [vmem:[#allocation2 + $0x170] sm:$0xff]
        %v347 = vld [vmem:[#allocation2 + $0x178] sm:$0xff]
        %v348 = vld [vmem:[#allocation2 + $0x180] sm:$0xff]
        %v349 = vld [vmem:[#allocation2 + $0x188] sm:$0xff]
        %v350 = vld [vmem:[#allocation2 + $0x190] sm:$0xff]
        %v351 = vld [vmem:[#allocation2 + $0x198] sm:$0xff]
        %v352 = vld [vmem:[#allocation2 + $0x1a0] sm:$0xff]
        %v353 = vld [vmem:[#allocation2 + $0x1a8] sm:$0xff]
        %v354 = vld [vmem:[#allocation2 + $0x1b0] sm:$0xff]
        %v355 = vld [vmem:[#allocation2 + $0x1b8] sm:$0xff]
        %v356 = vld [vmem:[#allocation2 + $0x1c0] sm:$0xff]
        %v357 = vld [vmem:[#allocation2 + $0x1c8] sm:$0xff]
        %v358 = vld [vmem:[#allocation2 + $0x1d0] sm:$0xff]
        %v359 = vld [vmem:[#allocation2 + $0x1d8] sm:$0xff]
        %v360 = vld [vmem:[#allocation2 + $0x1e0] sm:$0xff]
        %v361 = vld [vmem:[#allocation2 + $0x1e8] sm:$0xff]
        %v362 = vld [vmem:[#allocation2 + $0x1f0] sm:$0xff]
        %v363 = vld [vmem:[#allocation2 + $0x1f8] sm:$0xff]
        %v364 = vld [vmem:[#allocation2 + $0x200] sm:$0xff]
        %v365 = vld [vmem:[#allocation2 + $0x208] sm:$0xff]
        %v366 = vld [vmem:[#allocation2 + $0x210] sm:$0xff]
        %v367 = vld [vmem:[#allocation2 + $0x218] sm:$0xff]
        %v368 = vld [vmem:[#allocation2 + $0x220] sm:$0xff]
        %v369 = vld [vmem:[#allocation2 + $0x228] sm:$0xff]
        %v370 = vld [vmem:[#allocation2 + $0x230] sm:$0xff]
        %v371 = vld [vmem:[#allocation2 + $0x238] sm:$0xff]
        %v372 = vld [vmem:[#allocation2 + $0x240] sm:$0xff]
        %v373 = vld [vmem:[#allocation2 + $0x248] sm:$0xff]
        %v374 = vld [vmem:[#allocation2 + $0x250] sm:$0xff]
        %v375 = vld [vmem:[#allocation2 + $0x258] sm:$0xff]
        %v376 = vld [vmem:[#allocation2 + $0x260] sm:$0xff]
        %v377 = vld [vmem:[#allocation2 + $0x268] sm:$0xff]
        %v378 = vld [vmem:[#allocation2 + $0x270] sm:$0xff]
        %v379 = vld [vmem:[#allocation2 + $0x278] sm:$0xff]
        %v380 = vld [vmem:[#allocation2 + $0x280] sm:$0xff]
        %v381 = vld [vmem:[#allocation2 + $0x288] sm:$0xff]
        %v382 = vld [vmem:[#allocation2 + $0x290] sm:$0xff]
        %v383 = vld [vmem:[#allocation2 + $0x298] sm:$0xff]
        %v384 = vld [vmem:[#allocation2 + $0x2a0] sm:$0xff]
        %v385 = vld [vmem:[#allocation2 + $0x2a8] sm:$0xff]
        %v386 = vld [vmem:[#allocation2 + $0x2b0] sm:$0xff]
        %v387 = vld [vmem:[#allocation2 + $0x2b8] sm:$0xff]
        %v388 = vld [vmem:[#allocation2 + $0x2c0] sm:$0xff]
        %v389 = vld [vmem:[#allocation2 + $0x2c8] sm:$0xff]
        %v390 = vld [vmem:[#allocation2 + $0x2d0] sm:$0xff]
        %v391 = vld [vmem:[#allocation2 + $0x2d8] sm:$0xff]
        %v392 = vld [vmem:[#allocation2 + $0x2e0] sm:$0xff]
        %v393 = vld [vmem:[#allocation2 + $0x2e8] sm:$0xff]
        %v394 = vld [vmem:[#allocation2 + $0x2f0] sm:$0xff]
        %v395 = vld [vmem:[#allocation2 + $0x2f8] sm:$0xff]
        %v396 = vld [vmem:[#allocation2 + $0x300] sm:$0xff]
        %v397 = vld [vmem:[#allocation2 + $0x308] sm:$0xff]
        %v398 = vld [vmem:[#allocation2 + $0x310] sm:$0xff]
        %v399 = vld [vmem:[#allocation2 + $0x318] sm:$0xff]
        %v400 = vld [vmem:[#allocation2 + $0x320] sm:$0xff]
        %v401 = vld [vmem:[#allocation2 + $0x328] sm:$0xff]
        %v402 = vld [vmem:[#allocation2 + $0x330] sm:$0xff]
        %v403 = vld [vmem:[#allocation2 + $0x338] sm:$0xff]
        %v404 = vld [vmem:[#allocation2 + $0x340] sm:$0xff]
        %v405 = vld [vmem:[#allocation2 + $0x348] sm:$0xff]
        %v406 = vld [vmem:[#allocation2 + $0x350] sm:$0xff]
        %v407 = vld [vmem:[#allocation2 + $0x358] sm:$0xff]
        %v408 = vld [vmem:[#allocation2 + $0x360] sm:$0xff]
        %v409 = vld [vmem:[#allocation2 + $0x368] sm:$0xff]
        %v410 = vld [vmem:[#allocation2 + $0x370] sm:$0xff]
        %v411 = vld [vmem:[#allocation2 + $0x378] sm:$0xff]
        %v412 = vld [vmem:[#allocation2 + $0x380] sm:$0xff]
        %v413 = vld [vmem:[#allocation2 + $0x388] sm:$0xff]
        %v414 = vld [vmem:[#allocation2 + $0x390] sm:$0xff]
        %v415 = vld [vmem:[#allocation2 + $0x398] sm:$0xff]
        %v416 = vld [vmem:[#allocation2 + $0x3a0] sm:$0xff]
        %v417 = vld [vmem:[#allocation2 + $0x3a8] sm:$0xff]
        %v418 = vld [vmem:[#allocation2 + $0x3b0] sm:$0xff]
        %v419 = vld [vmem:[#allocation2 + $0x3b8] sm:$0xff]
        %v420 = vld [vmem:[#allocation2 + $0x3c0] sm:$0xff]
        %v421 = vld [vmem:[#allocation2 + $0x3c8] sm:$0xff]
        %v422 = vld [vmem:[#allocation2 + $0x3d0] sm:$0xff]
        %v423 = vld [vmem:[#allocation2 + $0x3d8] sm:$0xff]
        %v424 = vld [vmem:[#allocation2 + $0x3e0] sm:$0xff]
        %v425 = vld [vmem:[#allocation2 + $0x3e8] sm:$0xff]
        %v426 = vld [vmem:[#allocation2 + $0x3f0] sm:$0xff]
        %v427 = vld [vmem:[#allocation2 + $0x3f8] sm:$0xff]
        %v428 = vld [vmem:[#allocation2 + $0x400] sm:$0xff]
        %v429 = vld [vmem:[#allocation2 + $0x408] sm:$0xff]
        %v430 = vld [vmem:[#allocation2 + $0x410] sm:$0xff]
        %v431 = vld [vmem:[#allocation2 + $0x418] sm:$0xff]
        %v432 = vld [vmem:[#allocation2 + $0x420] sm:$0xff]
        %v433 = vld [vmem:[#allocation2 + $0x428] sm:$0xff]
        %v434 = vld [vmem:[#allocation2 + $0x430] sm:$0xff]
        %v435 = vld [vmem:[#allocation2 + $0x438] sm:$0xff]
        %v436 = vld [vmem:[#allocation2 + $0x440] sm:$0xff]
        %v437 = vld [vmem:[#allocation2 + $0x448] sm:$0xff]
        %v438 = vld [vmem:[#allocation2 + $0x450] sm:$0xff]
        %v439 = vld [vmem:[#allocation2 + $0x458] sm:$0xff]
        %v440 = vld [vmem:[#allocation2 + $0x460] sm:$0xff]
        %v441 = vld [vmem:[#allocation2 + $0x468] sm:$0xff]
        %v442 = vld [vmem:[#allocation2 + $0x470] sm:$0xff]
        %v443 = vld [vmem:[#allocation2 + $0x478] sm:$0xff]
        %v444 = vld [vmem:[#allocation2 + $0x480] sm:$0xff]
        %v445 = vld [vmem:[#allocation2 + $0x488] sm:$0xff]
        %v446 = vld [vmem:[#allocation2 + $0x490] sm:$0xff]
        %v447 = vld [vmem:[#allocation2 + $0x498] sm:$0xff]
        %v448 = vld [vmem:[#allocation2 + $0x4a0] sm:$0xff]
        %v449 = vld [vmem:[#allocation2 + $0x4a8] sm:$0xff]
        %v450 = vld [vmem:[#allocation2 + $0x4b0] sm:$0xff]
        %v451 = vld [vmem:[#allocation2 + $0x4b8] sm:$0xff]
        %v452 = vld [vmem:[#allocation2 + $0x4c0] sm:$0xff]
        %v453 = vld [vmem:[#allocation2 + $0x4c8] sm:$0xff]
        %v454 = vld [vmem:[#allocation2 + $0x4d0] sm:$0xff]
        %v455 = vld [vmem:[#allocation2 + $0x4d8] sm:$0xff]
        %v456 = vld [vmem:[#allocation2 + $0x4e0] sm:$0xff]
        %v457 = vld [vmem:[#allocation2 + $0x4e8] sm:$0xff]
        %v458 = vld [vmem:[#allocation2 + $0x4f0] sm:$0xff]
        %v459 = vld [vmem:[#allocation2 + $0x4f8] sm:$0xff]
        %460 = vmatprep.subr.mxu0 %v301
        %461 = vmatpush1.msra.mxu0 %v300
        %462 = vmatprep.subr.mxu0 %v303
        %463 = vmatpush1.msra.mxu0 %v302
        %464 = vmatprep.subr.mxu0 %v305
        %465 = vmatpush1.msra.mxu0 %v304
        %466 = vmatprep.subr.mxu0 %v307
        %467 = vmatpush1.msra.mxu0 %v306
        %468 = vmatprep.subr.mxu0 %v309
        %469 = vmatpush1.msra.mxu0 %v308
        %470 = vmatprep.subr.mxu0 %v311
        %471 = vmatpush1.msra.mxu0 %v310
        %472 = vmatprep.subr.mxu0 %v313
        %473 = vmatpush1.msra.mxu0 %v312
        %474 = vmatprep.subr.mxu0 %v315
        %475 = vmatpush1.msra.mxu0 %v314
        %476 = vmatprep.subr.mxu0 %v317
        %477 = vmatpush1.msra.mxu0 %v316
        %478 = vmatprep.subr.mxu0 %v319
        %479 = vmatpush1.msra.mxu0 %v318
        %480 = vmatprep.subr.mxu0 %v321
        %481 = vmatpush1.msra.mxu0 %v320
        %482 = vmatprep.subr.mxu0 %v323
        %483 = vmatpush1.msra.mxu0 %v322
        %484 = vmatprep.subr.mxu0 %v325
        %485 = vmatpush1.msra.mxu0 %v324
        %486 = vmatprep.subr.mxu0 %v327
        %487 = vmatpush1.msra.mxu0 %v326
        %488 = vmatprep.subr.mxu0 %v329
        %489 = vmatpush1.msra.mxu0 %v328
        %490 = vmatprep.subr.mxu0 %v331
        %491 = vmatpush1.msra.mxu0 %v330
        %492 = vmatprep.subr.mxu0 %v333
        %493 = vmatpush1.msra.mxu0 %v332
        %494 = vmatprep.subr.mxu0 %v335
        %495 = vmatpush1.msra.mxu0 %v334
        %496 = vmatprep.subr.mxu0 %v337
        %497 = vmatpush1.msra.mxu0 %v336
        %498 = vmatprep.subr.mxu0 %v339
        %499 = vmatpush1.msra.mxu0 %v338
        %500 = vmatprep.subr.mxu0 %v341
        %501 = vmatpush1.msra.mxu0 %v340
        %502 = vmatprep.subr.mxu0 %v343
        %503 = vmatpush1.msra.mxu0 %v342
        %504 = vmatprep.subr.mxu0 %v345
        %505 = vmatpush1.msra.mxu0 %v344
        %506 = vmatprep.subr.mxu0 %v347
        %507 = vmatpush1.msra.mxu0 %v346
        %508 = vmatprep.subr.mxu0 %v349
        %509 = vmatpush1.msra.mxu0 %v348
        %510 = vmatprep.subr.mxu0 %v351
        %511 = vmatpush1.msra.mxu0 %v350
        %512 = vmatprep.subr.mxu0 %v353
        %513 = vmatpush1.msra.mxu0 %v352
        %514 = vmatprep.subr.mxu0 %v355
        %515 = vmatpush1.msra.mxu0 %v354
        %516 = vmatprep.subr.mxu0 %v357
        %517 = vmatpush1.msra.mxu0 %v356
        %518 = vmatprep.subr.mxu0 %v359
        %519 = vmatpush1.msra.mxu0 %v358
        %520 = vmatprep.subr.mxu0 %v361
        %521 = vmatpush1.msra.mxu0 %v360
        %522 = vmatprep.subr.mxu0 %v363
        %523 = vmatpush1.msra.mxu0 %v362
        %524 = vmatprep.mubr.f32.mxu0 %v281
        %525 = vmatmul.mubr.f32.gmra.mrb[0].mxu0 %v265
        %v526 = vpop.f32.mrb[0].mxu0
        %v527 = vadd.f32 0.0, %v526
        %v528 = vpop.f32.mrb[0].mxu0
        %v529 = vadd.f32 0.0, %v528
        %530 = vmatprep.mubr.f32.mxu0 %v282
        %531 = vmatmul.mubr.f32.gmra.mrb[0].mxu0 %v266
        %v532 = vpop.f32.mrb[0].mxu0
        %v533 = vadd.f32 0.0, %v532
        %v534 = vpop.f32.mrb[0].mxu0
        %v535 = vadd.f32 0.0, %v534
        %536 = vmatprep.mubr.f32.mxu0 %v283
        %537 = vmatmul.mubr.f32.gmra.mrb[0].mxu0 %v267
        %v538 = vpop.f32.mrb[0].mxu0
        %v539 = vadd.f32 0.0, %v538
        %v540 = vpop.f32.mrb[0].mxu0
        %v541 = vadd.f32 0.0, %v540
        %542 = vmatprep.mubr.f32.mxu0 %v284
        %543 = vmatmul.mubr.f32.gmra.mrb[0].mxu0 %v268
        %v544 = vpop.f32.mrb[0].mxu0
        %v545 = vadd.f32 0.0, %v544
        %v546 = vpop.f32.mrb[0].mxu0
        %v547 = vadd.f32 0.0, %v546
        %548 = vmatprep.mubr.f32.mxu0 %v285
        %549 = vmatmul.mubr.f32.gmra.mrb[0].mxu0 %v269
        %v550 = vpop.f32.mrb[0].mxu0
        %v551 = vadd.f32 0.0, %v550
        %v552 = vpop.f32.mrb[0].mxu0
        %v553 = vadd.f32 0.0, %v552
        %554 = vmatprep.mubr.f32.mxu0 %v286
        %555 = vmatmul.mubr.f32.gmra.mrb[0].mxu0 %v270
        %v556 = vpop.f32.mrb[0].mxu0
        %v557 = vadd.f32 0.0, %v556
        %v558 = vpop.f32.mrb[0].mxu0
        %v559 = vadd.f32 0.0, %v558
        %560 = vmatprep.mubr.f32.mxu0 %v287
        %561 = vmatmul.mubr.f32.gmra.mrb[0].mxu0 %v271
        %v562 = vpop.f32.mrb[0].mxu0
        %v563 = vadd.f32 0.0, %v562
        %v564 = vpop.f32.mrb[0].mxu0
        %v565 = vadd.f32 0.0, %v564
        %566 = vmatprep.mubr.f32.mxu0 %v288
        %567 = vmatmul.mubr.f32.gmra.mrb[0].mxu0 %v272
        %v568 = vpop.f32.mrb[0].mxu0
        %v569 = vadd.f32 0.0, %v568
        %v570 = vpop.f32.mrb[0].mxu0
        %v571 = vadd.f32 0.0, %v570
        %572 = vmatprep.mubr.f32.mxu0 %v289
        %573 = vmatmul.mubr.f32.gmra.mrb[0].mxu0 %v273
        %v574 = vpop.f32.mrb[0].mxu0
        %v575 = vadd.f32 0.0, %v574
        %v576 = vpop.f32.mrb[0].mxu0
        %v577 = vadd.f32 0.0, %v576
        %578 = vmatprep.mubr.f32.mxu0 %v290
        %579 = vmatmul.mubr.f32.gmra.mrb[0].mxu0 %v274
        %v580 = vpop.f32.mrb[0].mxu0
        %v581 = vadd.f32 0.0, %v580
        %v582 = vpop.f32.mrb[0].mxu0
        %v583 = vadd.f32 0.0, %v582
        %584 = vmatprep.mubr.f32.mxu0 %v291
        %585 = vmatmul.mubr.f32.gmra.mrb[0].mxu0 %v275
        %v586 = vpop.f32.mrb[0].mxu0
        %v587 = vadd.f32 0.0, %v586
        %v588 = vpop.f32.mrb[0].mxu0
        %v589 = vadd.f32 0.0, %v588
        %590 = vmatprep.mubr.f32.mxu0 %v292
        %591 = vmatmul.mubr.f32.gmra.mrb[0].mxu0 %v276
        %v592 = vpop.f32.mrb[0].mxu0
        %v593 = vadd.f32 0.0, %v592
        %v594 = vpop.f32.mrb[0].mxu0
        %v595 = vadd.f32 0.0, %v594
        %596 = vmatprep.mubr.f32.mxu0 %v293
        %597 = vmatmul.mubr.f32.gmra.mrb[0].mxu0 %v277
        %v598 = vpop.f32.mrb[0].mxu0
        %v599 = vadd.f32 0.0, %v598
        %v600 = vpop.f32.mrb[0].mxu0
        %v601 = vadd.f32 0.0, %v600
        %602 = vmatprep.mubr.f32.mxu0 %v294
        %603 = vmatmul.mubr.f32.gmra.mrb[0].mxu0 %v278
        %v604 = vpop.f32.mrb[0].mxu0
        %v605 = vadd.f32 0.0, %v604
        %v606 = vpop.f32.mrb[0].mxu0
        %v607 = vadd.f32 0.0, %v606
        %608 = vmatprep.mubr.f32.mxu0 %v295
        %609 = vmatmul.mubr.f32.gmra.mrb[0].mxu0 %v279
        %v610 = vpop.f32.mrb[0].mxu0
        %v611 = vadd.f32 0.0, %v610
        %v612 = vpop.f32.mrb[0].mxu0
        %v613 = vadd.f32 0.0, %v612
        %614 = vmatprep.mubr.f32.mxu0 %v296
        %615 = vmatmul.mubr.f32.gmra.mrb[0].mxu0 %v280
        %v616 = vpop.f32.mrb[0].mxu0
        %v617 = vadd.f32 0.0, %v616
        %v618 = vpop.f32.mrb[0].mxu0
        %v619 = vadd.f32 0.0, %v618
        %620 = vdwg.mxu0
        %621 = vmatprep.subr.mxu0 %v365
        %622 = vmatpush1.msra.mxu0 %v364
        %623 = vmatprep.subr.mxu0 %v367
        %624 = vmatpush1.msra.mxu0 %v366
        %625 = vmatprep.subr.mxu0 %v369
        %626 = vmatpush1.msra.mxu0 %v368
        %627 = vmatprep.subr.mxu0 %v371
        %628 = vmatpush1.msra.mxu0 %v370
        %629 = vmatprep.subr.mxu0 %v373
        %630 = vmatpush1.msra.mxu0 %v372
        %631 = vmatprep.subr.mxu0 %v375
        %632 = vmatpush1.msra.mxu0 %v374
        %633 = vmatprep.subr.mxu0 %v377
        %634 = vmatpush1.msra.mxu0 %v376
        %635 = vmatprep.subr.mxu0 %v379
        %636 = vmatpush1.msra.mxu0 %v378
        %637 = vmatprep.subr.mxu0 %v381
        %638 = vmatpush1.msra.mxu0 %v380
        %639 = vmatprep.subr.mxu0 %v383
        %640 = vmatpush1.msra.mxu0 %v382
        %641 = vmatprep.subr.mxu0 %v385
        %642 = vmatpush1.msra.mxu0 %v384
        %643 = vmatprep.subr.mxu0 %v387
        %644 = vmatpush1.msra.mxu0 %v386
        %645 = vmatprep.subr.mxu0 %v389
        %646 = vmatpush1.msra.mxu0 %v388
        %647 = vmatprep.subr.mxu0 %v391
        %648 = vmatpush1.msra.mxu0 %v390
        %649 = vmatprep.subr.mxu0 %v393
        %650 = vmatpush1.msra.mxu0 %v392
        %651 = vmatprep.subr.mxu0 %v395
        %652 = vmatpush1.msra.mxu0 %v394
        %653 = vmatprep.subr.mxu0 %v397
        %654 = vmatpush1.msra.mxu0 %v396
        %655 = vmatprep.subr.mxu0 %v399
        %656 = vmatpush1.msra.mxu0 %v398
        %657 = vmatprep.subr.mxu0 %v401
        %658 = vmatpush1.msra.mxu0 %v400
        %659 = vmatprep.subr.mxu0 %v403
        %660 = vmatpush1.msra.mxu0 %v402
        %661 = vmatprep.subr.mxu0 %v405
        %662 = vmatpush1.msra.mxu0 %v404
        %663 = vmatprep.subr.mxu0 %v407
        %664 = vmatpush1.msra.mxu0 %v406
        %665 = vmatprep.subr.mxu0 %v409
        %666 = vmatpush1.msra.mxu0 %v408
        %667 = vmatprep.subr.mxu0 %v411
        %668 = vmatpush1.msra.mxu0 %v410
        %669 = vmatprep.subr.mxu0 %v413
        %670 = vmatpush1.msra.mxu0 %v412
        %671 = vmatprep.subr.mxu0 %v415
        %672 = vmatpush1.msra.mxu0 %v414
        %673 = vmatprep.subr.mxu0 %v417
        %674 = vmatpush1.msra.mxu0 %v416
        %675 = vmatprep.subr.mxu0 %v419
        %676 = vmatpush1.msra.mxu0 %v418
        %677 = vmatprep.subr.mxu0 %v421
        %678 = vmatpush1.msra.mxu0 %v420
        %679 = vmatprep.subr.mxu0 %v423
        %680 = vmatpush1.msra.mxu0 %v422
        %681 = vmatprep.subr.mxu0 %v425
        %682 = vmatpush1.msra.mxu0 %v424
        %683 = vmatprep.subr.mxu0 %v427
        %684 = vmatpush1.msra.mxu0 %v426
        %685 = vmatprep.mubr.f32.mxu0 %v282
        %686 = vmatmul.mubr.f32.gmra.mrb[0].mxu0 %v266
        %v687 = vpop.f32.mrb[0].mxu0
        %v688 = vadd.f32 %v527, %v687
        %v689 = vpop.f32.mrb[0].mxu0
        %v690 = vadd.f32 %v529, %v689
        %691 = vmatprep.mubr.f32.mxu0 %v283
        %692 = vmatmul.mubr.f32.gmra.mrb[0].mxu0 %v267
        %v693 = vpop.f32.mrb[0].mxu0
        %v694 = vadd.f32 %v533, %v693
        %v695 = vpop.f32.mrb[0].mxu0
        %v696 = vadd.f32 %v535, %v695
        %697 = vmatprep.mubr.f32.mxu0 %v284
        %698 = vmatmul.mubr.f32.gmra.mrb[0].mxu0 %v268
        %v699 = vpop.f32.mrb[0].mxu0
        %v700 = vadd.f32 %v539, %v699
        %v701 = vpop.f32.mrb[0].mxu0
        %v702 = vadd.f32 %v541, %v701
        %703 = vmatprep.mubr.f32.mxu0 %v285
        %704 = vmatmul.mubr.f32.gmra.mrb[0].mxu0 %v269
        %v705 = vpop.f32.mrb[0].mxu0
        %v706 = vadd.f32 %v545, %v705
        %v707 = vpop.f32.mrb[0].mxu0
        %v708 = vadd.f32 %v547, %v707
        %709 = vmatprep.mubr.f32.mxu0 %v286
        %710 = vmatmul.mubr.f32.gmra.mrb[0].mxu0 %v270
        %v711 = vpop.f32.mrb[0].mxu0
        %v712 = vadd.f32 %v551, %v711
        %v713 = vpop.f32.mrb[0].mxu0
        %v714 = vadd.f32 %v553, %v713
        %715 = vmatprep.mubr.f32.mxu0 %v287
        %716 = vmatmul.mubr.f32.gmra.mrb[0].mxu0 %v271
        %v717 = vpop.f32.mrb[0].mxu0
        %v718 = vadd.f32 %v557, %v717
        %v719 = vpop.f32.mrb[0].mxu0
        %v720 = vadd.f32 %v559, %v719
        %721 = vmatprep.mubr.f32.mxu0 %v288
        %722 = vmatmul.mubr.f32.gmra.mrb[0].mxu0 %v272
        %v723 = vpop.f32.mrb[0].mxu0
        %v724 = vadd.f32 %v563, %v723
        %v725 = vpop.f32.mrb[0].mxu0
        %v726 = vadd.f32 %v565, %v725
        %727 = vmatprep.mubr.f32.mxu0 %v289
        %728 = vmatmul.mubr.f32.gmra.mrb[0].mxu0 %v273
        %v729 = vpop.f32.mrb[0].mxu0
        %v730 = vadd.f32 %v569, %v729
        %v731 = vpop.f32.mrb[0].mxu0
        %v732 = vadd.f32 %v571, %v731
        %733 = vmatprep.mubr.f32.mxu0 %v290
        %734 = vmatmul.mubr.f32.gmra.mrb[0].mxu0 %v274
        %v735 = vpop.f32.mrb[0].mxu0
        %v736 = vadd.f32 %v575, %v735
        %v737 = vpop.f32.mrb[0].mxu0
        %v738 = vadd.f32 %v577, %v737
        %739 = vmatprep.mubr.f32.mxu0 %v291
        %740 = vmatmul.mubr.f32.gmra.mrb[0].mxu0 %v275
        %v741 = vpop.f32.mrb[0].mxu0
        %v742 = vadd.f32 %v581, %v741
        %v743 = vpop.f32.mrb[0].mxu0
        %v744 = vadd.f32 %v583, %v743
        %745 = vmatprep.mubr.f32.mxu0 %v292
        %746 = vmatmul.mubr.f32.gmra.mrb[0].mxu0 %v276
        %v747 = vpop.f32.mrb[0].mxu0
        %v748 = vadd.f32 %v587, %v747
        %v749 = vpop.f32.mrb[0].mxu0
        %v750 = vadd.f32 %v589, %v749
        %751 = vmatprep.mubr.f32.mxu0 %v293
        %752 = vmatmul.mubr.f32.gmra.mrb[0].mxu0 %v277
        %v753 = vpop.f32.mrb[0].mxu0
        %v754 = vadd.f32 %v593, %v753
        %v755 = vpop.f32.mrb[0].mxu0
        %v756 = vadd.f32 %v595, %v755
        %757 = vmatprep.mubr.f32.mxu0 %v294
        %758 = vmatmul.mubr.f32.gmra.mrb[0].mxu0 %v278
        %v759 = vpop.f32.mrb[0].mxu0
        %v760 = vadd.f32 %v599, %v759
        %v761 = vpop.f32.mrb[0].mxu0
        %v762 = vadd.f32 %v601, %v761
        %763 = vmatprep.mubr.f32.mxu0 %v295
        %764 = vmatmul.mubr.f32.gmra.mrb[0].mxu0 %v279
        %v765 = vpop.f32.mrb[0].mxu0
        %v766 = vadd.f32 %v605, %v765
        %v767 = vpop.f32.mrb[0].mxu0
        %v768 = vadd.f32 %v607, %v767
        %769 = vmatprep.mubr.f32.mxu0 %v296
        %770 = vmatmul.mubr.f32.gmra.mrb[0].mxu0 %v280
        %v771 = vpop.f32.mrb[0].mxu0
        %v772 = vadd.f32 %v611, %v771
        %v773 = vpop.f32.mrb[0].mxu0
        %v774 = vadd.f32 %v613, %v773
        %775 = vmatprep.mubr.f32.mxu0 %v298
        %776 = vmatmul.mubr.f32.gmra.mrb[0].mxu0 %v297
        %v777 = vpop.f32.mrb[0].mxu0
        %v778 = vadd.f32 %v617, %v777
        %v779 = vpop.f32.mrb[0].mxu0
        %v780 = vadd.f32 %v619, %v779
        %781 = vdwg.mxu0
        %782 = vmatprep.subr.mxu0 %v429
        %783 = vmatpush1.msra.mxu0 %v428
        %784 = vmatprep.subr.mxu0 %v431
        %785 = vmatpush1.msra.mxu0 %v430
        %786 = vmatprep.subr.mxu0 %v433
        %787 = vmatpush1.msra.mxu0 %v432
        %788 = vmatprep.subr.mxu0 %v435
        %789 = vmatpush1.msra.mxu0 %v434
        %790 = vmatprep.subr.mxu0 %v437
        %791 = vmatpush1.msra.mxu0 %v436
        %792 = vmatprep.subr.mxu0 %v439
        %793 = vmatpush1.msra.mxu0 %v438
        %794 = vmatprep.subr.mxu0 %v441
        %795 = vmatpush1.msra.mxu0 %v440
        %796 = vmatprep.subr.mxu0 %v443
        %797 = vmatpush1.msra.mxu0 %v442
        %798 = vmatprep.subr.mxu0 %v445
        %799 = vmatpush1.msra.mxu0 %v444
        %800 = vmatprep.subr.mxu0 %v447
        %801 = vmatpush1.msra.mxu0 %v446
        %802 = vmatprep.subr.mxu0 %v449
        %803 = vmatpush1.msra.mxu0 %v448
        %804 = vmatprep.subr.mxu0 %v451
        %805 = vmatpush1.msra.mxu0 %v450
        %806 = vmatprep.subr.mxu0 %v453
        %807 = vmatpush1.msra.mxu0 %v452
        %808 = vmatprep.subr.mxu0 %v455
        %809 = vmatpush1.msra.mxu0 %v454
        %810 = vmatprep.subr.mxu0 %v457
        %811 = vmatpush1.msra.mxu0 %v456
        %812 = vmatprep.subr.mxu0 %v459
        %813 = vmatpush1.msra.mxu0 %v458
        %814 = vmatprep.subr.mxu0 0.0
        %815 = vmatpush1.msra.mxu0 0.0
        %816 = vmatprep.subr.mxu0 0.0
        %817 = vmatpush1.msra.mxu0 0.0
        %818 = vmatprep.subr.mxu0 0.0
        %819 = vmatpush1.msra.mxu0 0.0
        %820 = vmatprep.subr.mxu0 0.0
        %821 = vmatpush1.msra.mxu0 0.0
        %822 = vmatprep.subr.mxu0 0.0
        %823 = vmatpush1.msra.mxu0 0.0
        %824 = vmatprep.subr.mxu0 0.0
        %825 = vmatpush1.msra.mxu0 0.0
        %826 = vmatprep.subr.mxu0 0.0
        %827 = vmatpush1.msra.mxu0 0.0
        %828 = vmatprep.subr.mxu0 0.0
        %829 = vmatpush1.msra.mxu0 0.0
        %830 = vmatprep.subr.mxu0 0.0
        %831 = vmatpush1.msra.mxu0 0.0
        %832 = vmatprep.subr.mxu0 0.0
        %833 = vmatpush1.msra.mxu0 0.0
        %834 = vmatprep.subr.mxu0 0.0
        %835 = vmatpush1.msra.mxu0 0.0
        %836 = vmatprep.subr.mxu0 0.0
        %837 = vmatpush1.msra.mxu0 0.0
        %838 = vmatprep.subr.mxu0 0.0
        %839 = vmatpush1.msra.mxu0 0.0
        %840 = vmatprep.subr.mxu0 0.0
        %841 = vmatpush1.msra.mxu0 0.0
        %842 = vmatprep.subr.mxu0 0.0
        %843 = vmatpush1.msra.mxu0 0.0
        %844 = vmatprep.subr.mxu0 0.0
        %845 = vmatpush1.msra.mxu0 0.0
        %846 = vmatprep.mubr.f32.mxu0 0.0
        %847 = vmatmul.mubr.f32.gmra.mrb[0].mxu0 %v267
        %v848 = vpop.f32.mrb[0].mxu0
        %v849 = vadd.f32 %v688, %v848
        %v850 = vpop.f32.mrb[0].mxu0
        %v851 = vadd.f32 %v690, %v850
        %852 = vmatprep.mubr.f32.mxu0 0.0
        %853 = vmatmul.mubr.f32.gmra.mrb[0].mxu0 %v268
        %v854 = vpop.f32.mrb[0].mxu0
        %v855 = vadd.f32 %v694, %v854
        %v856 = vpop.f32.mrb[0].mxu0
        %v857 = vadd.f32 %v696, %v856
        %858 = vmatprep.mubr.f32.mxu0 0.0
        %859 = vmatmul.mubr.f32.gmra.mrb[0].mxu0 %v269
        %v860 = vpop.f32.mrb[0].mxu0
        %v861 = vadd.f32 %v700, %v860
        %v862 = vpop.f32.mrb[0].mxu0
        %v863 = vadd.f32 %v702, %v862
        %864 = vmatprep.mubr.f32.mxu0 0.0
        %865 = vmatmul.mubr.f32.gmra.mrb[0].mxu0 %v270
        %v866 = vpop.f32.mrb[0].mxu0
        %v867 = vadd.f32 %v706, %v866
        %v868 = vpop.f32.mrb[0].mxu0
        %v869 = vadd.f32 %v708, %v868
        %870 = vmatprep.mubr.f32.mxu0 0.0
        %871 = vmatmul.mubr.f32.gmra.mrb[0].mxu0 %v271
        %v872 = vpop.f32.mrb[0].mxu0
        %v873 = vadd.f32 %v712, %v872
        %v874 = vpop.f32.mrb[0].mxu0
        %v875 = vadd.f32 %v714, %v874
        %876 = vmatprep.mubr.f32.mxu0 0.0
        %877 = vmatmul.mubr.f32.gmra.mrb[0].mxu0 %v272
        %v878 = vpop.f32.mrb[0].mxu0
        %v879 = vadd.f32 %v718, %v878
        %v880 = vpop.f32.mrb[0].mxu0
        %v881 = vadd.f32 %v720, %v880
        %882 = vmatprep.mubr.f32.mxu0 0.0
        %883 = vmatmul.mubr.f32.gmra.mrb[0].mxu0 %v273
        %v884 = vpop.f32.mrb[0].mxu0
        %v885 = vadd.f32 %v724, %v884
        %v886 = vpop.f32.mrb[0].mxu0
        %v887 = vadd.f32 %v726, %v886
        %888 = vmatprep.mubr.f32.mxu0 0.0
        %889 = vmatmul.mubr.f32.gmra.mrb[0].mxu0 %v274
        %v890 = vpop.f32.mrb[0].mxu0
        %v891 = vadd.f32 %v730, %v890
        %v892 = vpop.f32.mrb[0].mxu0
        %v893 = vadd.f32 %v732, %v892
        %894 = vmatprep.mubr.f32.mxu0 0.0
        %895 = vmatmul.mubr.f32.gmra.mrb[0].mxu0 %v275
        %v896 = vpop.f32.mrb[0].mxu0
        %v897 = vadd.f32 %v736, %v896
        %v898 = vpop.f32.mrb[0].mxu0
        %v899 = vadd.f32 %v738, %v898
        %900 = vmatprep.mubr.f32.mxu0 0.0
        %901 = vmatmul.mubr.f32.gmra.mrb[0].mxu0 %v276
        %v902 = vpop.f32.mrb[0].mxu0
        %v903 = vadd.f32 %v742, %v902
        %v904 = vpop.f32.mrb[0].mxu0
        %v905 = vadd.f32 %v744, %v904
        %906 = vmatprep.mubr.f32.mxu0 0.0
        %907 = vmatmul.mubr.f32.gmra.mrb[0].mxu0 %v277
        %v908 = vpop.f32.mrb[0].mxu0
        %v909 = vadd.f32 %v748, %v908
        %v910 = vpop.f32.mrb[0].mxu0
        %v911 = vadd.f32 %v750, %v910
        %912 = vmatprep.mubr.f32.mxu0 0.0
        %913 = vmatmul.mubr.f32.gmra.mrb[0].mxu0 %v278
        %v914 = vpop.f32.mrb[0].mxu0
        %v915 = vadd.f32 %v754, %v914
        %v916 = vpop.f32.mrb[0].mxu0
        %v917 = vadd.f32 %v756, %v916
        %918 = vmatprep.mubr.f32.mxu0 0.0
        %919 = vmatmul.mubr.f32.gmra.mrb[0].mxu0 %v279
        %v920 = vpop.f32.mrb[0].mxu0
        %v921 = vadd.f32 %v760, %v920
        %v922 = vpop.f32.mrb[0].mxu0
        %v923 = vadd.f32 %v762, %v922
        %924 = vmatprep.mubr.f32.mxu0 0.0
        %925 = vmatmul.mubr.f32.gmra.mrb[0].mxu0 %v280
        %v926 = vpop.f32.mrb[0].mxu0
        %v927 = vadd.f32 %v766, %v926
        %v928 = vpop.f32.mrb[0].mxu0
        %v929 = vadd.f32 %v768, %v928
        %930 = vmatprep.mubr.f32.mxu0 0.0
        %931 = vmatmul.mubr.f32.gmra.mrb[0].mxu0 %v297
        %v932 = vpop.f32.mrb[0].mxu0
        %v933 = vadd.f32 %v772, %v932
        %v934 = vpop.f32.mrb[0].mxu0
        %v935 = vadd.f32 %v774, %v934
        %936 = vmatprep.mubr.f32.mxu0 0.0
        %937 = vmatmul.mubr.f32.gmra.mrb[0].mxu0 %v299
        %v938 = vpop.f32.mrb[0].mxu0
        %v939 = vadd.f32 %v778, %v938
        %v940 = vpop.f32.mrb[0].mxu0
        %v941 = vadd.f32 %v780, %v940
        %942 = vdwg.mxu0
        %v943 = vmax.f32 %v849, 0.0
        %v944 = vmax.f32 %v851, 0.0
        %v945 = vmax.f32 %v855, 0.0
        %v946 = vmax.f32 %v857, 0.0
        %v947 = vmax.f32 %v861, 0.0
        %v948 = vmax.f32 %v863, 0.0
        %v949 = vmax.f32 %v867, 0.0
        %v950 = vmax.f32 %v869, 0.0
        %v951 = vmax.f32 %v873, 0.0
        %v952 = vmax.f32 %v875, 0.0
        %v953 = vmax.f32 %v879, 0.0
        %v954 = vmax.f32 %v881, 0.0
        %v955 = vmax.f32 %v885, 0.0
        %v956 = vmax.f32 %v887, 0.0
        %v957 = vmax.f32 %v891, 0.0
        %v958 = vmax.f32 %v893, 0.0
        %v959 = vmax.f32 %v897, 0.0
        %v960 = vmax.f32 %v899, 0.0
        %v961 = vmax.f32 %v903, 0.0
        %v962 = vmax.f32 %v905, 0.0
        %v963 = vmax.f32 %v909, 0.0
        %v964 = vmax.f32 %v911, 0.0
        %v965 = vmax.f32 %v915, 0.0
        %v966 = vmax.f32 %v917, 0.0
        %v967 = vmax.f32 %v921, 0.0
        %v968 = vmax.f32 %v923, 0.0
        %v969 = vmax.f32 %v927, 0.0
        %v970 = vmax.f32 %v929, 0.0
        %v971 = vmax.f32 %v933, 0.0
        %v972 = vmax.f32 %v935, 0.0
        %v973 = vmax.f32 %v939, 0.0
        %v974 = vmax.f32 %v941, 0.0
        %v975 = vld [vmem:[%s264 + $0xa0] sm:$0xff]
        %v976 = vld [vmem:[%s264 + $0xa8] sm:$0xff]
        %v977 = vld [vmem:[%s264 + $0xb0] sm:$0xff]
        %v978 = vld [vmem:[%s264 + $0xb8] sm:$0xff]
        %v979 = vld [vmem:[%s264 + $0xc0] sm:$0xff]
        %v980 = vld [vmem:[%s264 + $0xc8] sm:$0xff]
        %v981 = vld [vmem:[%s264 + $0xd0] sm:$0xff]
        %v982 = vld [vmem:[%s264 + $0xd8] sm:$0xff]
        %v983 = vld [vmem:[%s264 + $0xe0] sm:$0xff]
        %v984 = vld [vmem:[%s264 + $0xe8] sm:$0xff]
        %v985 = vld [vmem:[%s264 + $0xf0] sm:$0xff]
        %v986 = vld [vmem:[%s264 + $0xf8] sm:$0xff]
        %v987 = vld [vmem:[%s264 + $0x100] sm:$0xff]
        %v988 = vld [vmem:[%s264 + $0x108] sm:$0xff]
        %v989 = vld [vmem:[%s264 + $0x110] sm:$0xff]
        %v990 = vld [vmem:[%s264 + $0x118] sm:$0xff]
        %991 = vmatprep.subr.mxu0 %v301
        %992 = vmatpush1.msra.mxu0 %v300
        %993 = vmatprep.subr.mxu0 %v303
        %994 = vmatpush1.msra.mxu0 %v302
        %995 = vmatprep.subr.mxu0 %v305
        %996 = vmatpush1.msra.mxu0 %v304
        %997 = vmatprep.subr.mxu0 %v307
        %998 = vmatpush1.msra.mxu0 %v306
        %999 = vmatprep.subr.mxu0 %v309
        %1000 = vmatpush1.msra.mxu0 %v308
        %1001 = vmatprep.subr.mxu0 %v311
        %1002 = vmatpush1.msra.mxu0 %v310
        %1003 = vmatprep.subr.mxu0 %v313
        %1004 = vmatpush1.msra.mxu0 %v312
        %1005 = vmatprep.subr.mxu0 %v315
        %1006 = vmatpush1.msra.mxu0 %v314
        %1007 = vmatprep.subr.mxu0 %v317
        %1008 = vmatpush1.msra.mxu0 %v316
        %1009 = vmatprep.subr.mxu0 %v319
        %1010 = vmatpush1.msra.mxu0 %v318
        %1011 = vmatprep.subr.mxu0 %v321
        %1012 = vmatpush1.msra.mxu0 %v320
        %1013 = vmatprep.subr.mxu0 %v323
        %1014 = vmatpush1.msra.mxu0 %v322
        %1015 = vmatprep.subr.mxu0 %v325
        %1016 = vmatpush1.msra.mxu0 %v324
        %1017 = vmatprep.subr.mxu0 %v327
        %1018 = vmatpush1.msra.mxu0 %v326
        %1019 = vmatprep.subr.mxu0 %v329
        %1020 = vmatpush1.msra.mxu0 %v328
        %1021 = vmatprep.subr.mxu0 %v331
        %1022 = vmatpush1.msra.mxu0 %v330
        %1023 = vmatprep.subr.mxu0 %v333
        %1024 = vmatpush1.msra.mxu0 %v332
        %1025 = vmatprep.subr.mxu0 %v335
        %1026 = vmatpush1.msra.mxu0 %v334
        %1027 = vmatprep.subr.mxu0 %v337
        %1028 = vmatpush1.msra.mxu0 %v336
        %1029 = vmatprep.subr.mxu0 %v339
        %1030 = vmatpush1.msra.mxu0 %v338
        %1031 = vmatprep.subr.mxu0 %v341
        %1032 = vmatpush1.msra.mxu0 %v340
        %1033 = vmatprep.subr.mxu0 %v343
        %1034 = vmatpush1.msra.mxu0 %v342
        %1035 = vmatprep.subr.mxu0 %v345
        %1036 = vmatpush1.msra.mxu0 %v344
        %1037 = vmatprep.subr.mxu0 %v347
        %1038 = vmatpush1.msra.mxu0 %v346
        %1039 = vmatprep.subr.mxu0 %v349
        %1040 = vmatpush1.msra.mxu0 %v348
        %1041 = vmatprep.subr.mxu0 %v351
        %1042 = vmatpush1.msra.mxu0 %v350
        %1043 = vmatprep.subr.mxu0 %v353
        %1044 = vmatpush1.msra.mxu0 %v352
        %1045 = vmatprep.subr.mxu0 %v355
        %1046 = vmatpush1.msra.mxu0 %v354
        %1047 = vmatprep.subr.mxu0 %v357
        %1048 = vmatpush1.msra.mxu0 %v356
        %1049 = vmatprep.subr.mxu0 %v359
        %1050 = vmatpush1.msra.mxu0 %v358
        %1051 = vmatprep.subr.mxu0 %v361
        %1052 = vmatpush1.msra.mxu0 %v360
        %1053 = vmatprep.subr.mxu0 %v363
        %1054 = vmatpush1.msra.mxu0 %v362
        %1055 = vmatprep.mubr.f32.mxu0 %v266
        %1056 = vmatmul.mubr.f32.gmra.mrb[0].mxu0 %v281
        %v1057 = vpop.f32.mrb[0].mxu0
        %v1058 = vadd.f32 0.0, %v1057
        %v1059 = vpop.f32.mrb[0].mxu0
        %v1060 = vadd.f32 0.0, %v1059
        %1061 = vmatprep.mubr.f32.mxu0 %v267
        %1062 = vmatmul.mubr.f32.gmra.mrb[0].mxu0 %v282
        %v1063 = vpop.f32.mrb[0].mxu0
        %v1064 = vadd.f32 0.0, %v1063
        %v1065 = vpop.f32.mrb[0].mxu0
        %v1066 = vadd.f32 0.0, %v1065
        %1067 = vmatprep.mubr.f32.mxu0 %v268
        %1068 = vmatmul.mubr.f32.gmra.mrb[0].mxu0 %v283
        %v1069 = vpop.f32.mrb[0].mxu0
        %v1070 = vadd.f32 0.0, %v1069
        %v1071 = vpop.f32.mrb[0].mxu0
        %v1072 = vadd.f32 0.0, %v1071
        %1073 = vmatprep.mubr.f32.mxu0 %v269
        %1074 = vmatmul.mubr.f32.gmra.mrb[0].mxu0 %v284
        %v1075 = vpop.f32.mrb[0].mxu0
        %v1076 = vadd.f32 0.0, %v1075
        %v1077 = vpop.f32.mrb[0].mxu0
        %v1078 = vadd.f32 0.0, %v1077
        %1079 = vmatprep.mubr.f32.mxu0 %v270
        %1080 = vmatmul.mubr.f32.gmra.mrb[0].mxu0 %v285
        %v1081 = vpop.f32.mrb[0].mxu0
        %v1082 = vadd.f32 0.0, %v1081
        %v1083 = vpop.f32.mrb[0].mxu0
        %v1084 = vadd.f32 0.0, %v1083
        %1085 = vmatprep.mubr.f32.mxu0 %v271
        %1086 = vmatmul.mubr.f32.gmra.mrb[0].mxu0 %v286
        %v1087 = vpop.f32.mrb[0].mxu0
        %v1088 = vadd.f32 0.0, %v1087
        %v1089 = vpop.f32.mrb[0].mxu0
        %v1090 = vadd.f32 0.0, %v1089
        %1091 = vmatprep.mubr.f32.mxu0 %v272
        %1092 = vmatmul.mubr.f32.gmra.mrb[0].mxu0 %v287
        %v1093 = vpop.f32.mrb[0].mxu0
        %v1094 = vadd.f32 0.0, %v1093
        %v1095 = vpop.f32.mrb[0].mxu0
        %v1096 = vadd.f32 0.0, %v1095
        %1097 = vmatprep.mubr.f32.mxu0 %v273
        %1098 = vmatmul.mubr.f32.gmra.mrb[0].mxu0 %v288
        %v1099 = vpop.f32.mrb[0].mxu0
        %v1100 = vadd.f32 0.0, %v1099
        %v1101 = vpop.f32.mrb[0].mxu0
        %v1102 = vadd.f32 0.0, %v1101
        %1103 = vmatprep.mubr.f32.mxu0 %v274
        %1104 = vmatmul.mubr.f32.gmra.mrb[0].mxu0 %v289
        %v1105 = vpop.f32.mrb[0].mxu0
        %v1106 = vadd.f32 0.0, %v1105
        %v1107 = vpop.f32.mrb[0].mxu0
        %v1108 = vadd.f32 0.0, %v1107
        %1109 = vmatprep.mubr.f32.mxu0 %v275
        %1110 = vmatmul.mubr.f32.gmra.mrb[0].mxu0 %v290
        %v1111 = vpop.f32.mrb[0].mxu0
        %v1112 = vadd.f32 0.0, %v1111
        %v1113 = vpop.f32.mrb[0].mxu0
        %v1114 = vadd.f32 0.0, %v1113
        %1115 = vmatprep.mubr.f32.mxu0 %v276
        %1116 = vmatmul.mubr.f32.gmra.mrb[0].mxu0 %v291
        %v1117 = vpop.f32.mrb[0].mxu0
        %v1118 = vadd.f32 0.0, %v1117
        %v1119 = vpop.f32.mrb[0].mxu0
        %v1120 = vadd.f32 0.0, %v1119
        %1121 = vmatprep.mubr.f32.mxu0 %v277
        %1122 = vmatmul.mubr.f32.gmra.mrb[0].mxu0 %v292
        %v1123 = vpop.f32.mrb[0].mxu0
        %v1124 = vadd.f32 0.0, %v1123
        %v1125 = vpop.f32.mrb[0].mxu0
        %v1126 = vadd.f32 0.0, %v1125
        %1127 = vmatprep.mubr.f32.mxu0 %v278
        %1128 = vmatmul.mubr.f32.gmra.mrb[0].mxu0 %v293
        %v1129 = vpop.f32.mrb[0].mxu0
        %v1130 = vadd.f32 0.0, %v1129
        %v1131 = vpop.f32.mrb[0].mxu0
        %v1132 = vadd.f32 0.0, %v1131
        %1133 = vmatprep.mubr.f32.mxu0 %v279
        %1134 = vmatmul.mubr.f32.gmra.mrb[0].mxu0 %v294
        %v1135 = vpop.f32.mrb[0].mxu0
        %v1136 = vadd.f32 0.0, %v1135
        %v1137 = vpop.f32.mrb[0].mxu0
        %v1138 = vadd.f32 0.0, %v1137
        %1139 = vmatprep.mubr.f32.mxu0 %v280
        %1140 = vmatmul.mubr.f32.gmra.mrb[0].mxu0 %v295
        %v1141 = vpop.f32.mrb[0].mxu0
        %v1142 = vadd.f32 0.0, %v1141
        %v1143 = vpop.f32.mrb[0].mxu0
        %v1144 = vadd.f32 0.0, %v1143
        %1145 = vmatprep.mubr.f32.mxu0 %v297
        %1146 = vmatmul.mubr.f32.gmra.mrb[0].mxu0 %v296
        %v1147 = vpop.f32.mrb[0].mxu0
        %v1148 = vadd.f32 0.0, %v1147
        %v1149 = vpop.f32.mrb[0].mxu0
        %v1150 = vadd.f32 0.0, %v1149
        %1151 = vdwg.mxu0
        %1152 = vmatprep.subr.mxu0 %v365
        %1153 = vmatpush1.msra.mxu0 %v364
        %1154 = vmatprep.subr.mxu0 %v367
        %1155 = vmatpush1.msra.mxu0 %v366
        %1156 = vmatprep.subr.mxu0 %v369
        %1157 = vmatpush1.msra.mxu0 %v368
        %1158 = vmatprep.subr.mxu0 %v371
        %1159 = vmatpush1.msra.mxu0 %v370
        %1160 = vmatprep.subr.mxu0 %v373
        %1161 = vmatpush1.msra.mxu0 %v372
        %1162 = vmatprep.subr.mxu0 %v375
        %1163 = vmatpush1.msra.mxu0 %v374
        %1164 = vmatprep.subr.mxu0 %v377
        %1165 = vmatpush1.msra.mxu0 %v376
        %1166 = vmatprep.subr.mxu0 %v379
        %1167 = vmatpush1.msra.mxu0 %v378
        %1168 = vmatprep.subr.mxu0 %v381
        %1169 = vmatpush1.msra.mxu0 %v380
        %1170 = vmatprep.subr.mxu0 %v383
        %1171 = vmatpush1.msra.mxu0 %v382
        %1172 = vmatprep.subr.mxu0 %v385
        %1173 = vmatpush1.msra.mxu0 %v384
        %1174 = vmatprep.subr.mxu0 %v387
        %1175 = vmatpush1.msra.mxu0 %v386
        %1176 = vmatprep.subr.mxu0 %v389
        %1177 = vmatpush1.msra.mxu0 %v388
        %1178 = vmatprep.subr.mxu0 %v391
        %1179 = vmatpush1.msra.mxu0 %v390
        %1180 = vmatprep.subr.mxu0 %v393
        %1181 = vmatpush1.msra.mxu0 %v392
        %1182 = vmatprep.subr.mxu0 %v395
        %1183 = vmatpush1.msra.mxu0 %v394
        %1184 = vmatprep.subr.mxu0 %v397
        %1185 = vmatpush1.msra.mxu0 %v396
        %1186 = vmatprep.subr.mxu0 %v399
        %1187 = vmatpush1.msra.mxu0 %v398
        %1188 = vmatprep.subr.mxu0 %v401
        %1189 = vmatpush1.msra.mxu0 %v400
        %1190 = vmatprep.subr.mxu0 %v403
        %1191 = vmatpush1.msra.mxu0 %v402
        %1192 = vmatprep.subr.mxu0 %v405
        %1193 = vmatpush1.msra.mxu0 %v404
        %1194 = vmatprep.subr.mxu0 %v407
        %1195 = vmatpush1.msra.mxu0 %v406
        %1196 = vmatprep.subr.mxu0 %v409
        %1197 = vmatpush1.msra.mxu0 %v408
        %1198 = vmatprep.subr.mxu0 %v411
        %1199 = vmatpush1.msra.mxu0 %v410
        %1200 = vmatprep.subr.mxu0 %v413
        %1201 = vmatpush1.msra.mxu0 %v412
        %1202 = vmatprep.subr.mxu0 %v415
        %1203 = vmatpush1.msra.mxu0 %v414
        %1204 = vmatprep.subr.mxu0 %v417
        %1205 = vmatpush1.msra.mxu0 %v416
        %1206 = vmatprep.subr.mxu0 %v419
        %1207 = vmatpush1.msra.mxu0 %v418
        %1208 = vmatprep.subr.mxu0 %v421
        %1209 = vmatpush1.msra.mxu0 %v420
        %1210 = vmatprep.subr.mxu0 %v423
        %1211 = vmatpush1.msra.mxu0 %v422
        %1212 = vmatprep.subr.mxu0 %v425
        %1213 = vmatpush1.msra.mxu0 %v424
        %1214 = vmatprep.subr.mxu0 %v427
        %1215 = vmatpush1.msra.mxu0 %v426
        %1216 = vmatprep.mubr.f32.mxu0 %v267
        %1217 = vmatmul.mubr.f32.gmra.mrb[0].mxu0 %v282
        %v1218 = vpop.f32.mrb[0].mxu0
        %v1219 = vadd.f32 %v1058, %v1218
        %v1220 = vpop.f32.mrb[0].mxu0
        %v1221 = vadd.f32 %v1060, %v1220
        %1222 = vmatprep.mubr.f32.mxu0 %v268
        %1223 = vmatmul.mubr.f32.gmra.mrb[0].mxu0 %v283
        %v1224 = vpop.f32.mrb[0].mxu0
        %v1225 = vadd.f32 %v1064, %v1224
        %v1226 = vpop.f32.mrb[0].mxu0
        %v1227 = vadd.f32 %v1066, %v1226
        %1228 = vmatprep.mubr.f32.mxu0 %v269
        %1229 = vmatmul.mubr.f32.gmra.mrb[0].mxu0 %v284
        %v1230 = vpop.f32.mrb[0].mxu0
        %v1231 = vadd.f32 %v1070, %v1230
        %v1232 = vpop.f32.mrb[0].mxu0
        %v1233 = vadd.f32 %v1072, %v1232
        %1234 = vmatprep.mubr.f32.mxu0 %v270
        %1235 = vmatmul.mubr.f32.gmra.mrb[0].mxu0 %v285
        %v1236 = vpop.f32.mrb[0].mxu0
        %v1237 = vadd.f32 %v1076, %v1236
        %v1238 = vpop.f32.mrb[0].mxu0
        %v1239 = vadd.f32 %v1078, %v1238
        %1240 = vmatprep.mubr.f32.mxu0 %v271
        %1241 = vmatmul.mubr.f32.gmra.mrb[0].mxu0 %v286
        %v1242 = vpop.f32.mrb[0].mxu0
        %v1243 = vadd.f32 %v1082, %v1242
        %v1244 = vpop.f32.mrb[0].mxu0
        %v1245 = vadd.f32 %v1084, %v1244
        %1246 = vmatprep.mubr.f32.mxu0 %v272
        %1247 = vmatmul.mubr.f32.gmra.mrb[0].mxu0 %v287
        %v1248 = vpop.f32.mrb[0].mxu0
        %v1249 = vadd.f32 %v1088, %v1248
        %v1250 = vpop.f32.mrb[0].mxu0
        %v1251 = vadd.f32 %v1090, %v1250
        %1252 = vmatprep.mubr.f32.mxu0 %v273
        %1253 = vmatmul.mubr.f32.gmra.mrb[0].mxu0 %v288
        %v1254 = vpop.f32.mrb[0].mxu0
        %v1255 = vadd.f32 %v1094, %v1254
        %v1256 = vpop.f32.mrb[0].mxu0
        %v1257 = vadd.f32 %v1096, %v1256
        %1258 = vmatprep.mubr.f32.mxu0 %v274
        %1259 = vmatmul.mubr.f32.gmra.mrb[0].mxu0 %v289
        %v1260 = vpop.f32.mrb[0].mxu0
        %v1261 = vadd.f32 %v1100, %v1260
        %v1262 = vpop.f32.mrb[0].mxu0
        %v1263 = vadd.f32 %v1102, %v1262
        %1264 = vmatprep.mubr.f32.mxu0 %v275
        %1265 = vmatmul.mubr.f32.gmra.mrb[0].mxu0 %v290
        %v1266 = vpop.f32.mrb[0].mxu0
        %v1267 = vadd.f32 %v1106, %v1266
        %v1268 = vpop.f32.mrb[0].mxu0
        %v1269 = vadd.f32 %v1108, %v1268
        %1270 = vmatprep.mubr.f32.mxu0 %v276
        %1271 = vmatmul.mubr.f32.gmra.mrb[0].mxu0 %v291
        %v1272 = vpop.f32.mrb[0].mxu0
        %v1273 = vadd.f32 %v1112, %v1272
        %v1274 = vpop.f32.mrb[0].mxu0
        %v1275 = vadd.f32 %v1114, %v1274
        %1276 = vmatprep.mubr.f32.mxu0 %v277
        %1277 = vmatmul.mubr.f32.gmra.mrb[0].mxu0 %v292
        %v1278 = vpop.f32.mrb[0].mxu0
        %v1279 = vadd.f32 %v1118, %v1278
        %v1280 = vpop.f32.mrb[0].mxu0
        %v1281 = vadd.f32 %v1120, %v1280
        %1282 = vmatprep.mubr.f32.mxu0 %v278
        %1283 = vmatmul.mubr.f32.gmra.mrb[0].mxu0 %v293
        %v1284 = vpop.f32.mrb[0].mxu0
        %v1285 = vadd.f32 %v1124, %v1284
        %v1286 = vpop.f32.mrb[0].mxu0
        %v1287 = vadd.f32 %v1126, %v1286
        %1288 = vmatprep.mubr.f32.mxu0 %v279
        %1289 = vmatmul.mubr.f32.gmra.mrb[0].mxu0 %v294
        %v1290 = vpop.f32.mrb[0].mxu0
        %v1291 = vadd.f32 %v1130, %v1290
        %v1292 = vpop.f32.mrb[0].mxu0
        %v1293 = vadd.f32 %v1132, %v1292
        %1294 = vmatprep.mubr.f32.mxu0 %v280
        %1295 = vmatmul.mubr.f32.gmra.mrb[0].mxu0 %v295
        %v1296 = vpop.f32.mrb[0].mxu0
        %v1297 = vadd.f32 %v1136, %v1296
        %v1298 = vpop.f32.mrb[0].mxu0
        %v1299 = vadd.f32 %v1138, %v1298
        %1300 = vmatprep.mubr.f32.mxu0 %v297
        %1301 = vmatmul.mubr.f32.gmra.mrb[0].mxu0 %v296
        %v1302 = vpop.f32.mrb[0].mxu0
        %v1303 = vadd.f32 %v1142, %v1302
        %v1304 = vpop.f32.mrb[0].mxu0
        %v1305 = vadd.f32 %v1144, %v1304
        %1306 = vmatprep.mubr.f32.mxu0 %v299
        %1307 = vmatmul.mubr.f32.gmra.mrb[0].mxu0 %v298
        %v1308 = vpop.f32.mrb[0].mxu0
        %v1309 = vadd.f32 %v1148, %v1308
        %v1310 = vpop.f32.mrb[0].mxu0
        %v1311 = vadd.f32 %v1150, %v1310
        %1312 = vdwg.mxu0
        %1313 = vmatprep.subr.mxu0 %v429
        %1314 = vmatpush1.msra.mxu0 %v428
        %1315 = vmatprep.subr.mxu0 %v431
        %1316 = vmatpush1.msra.mxu0 %v430
        %1317 = vmatprep.subr.mxu0 %v433
        %1318 = vmatpush1.msra.mxu0 %v432
        %1319 = vmatprep.subr.mxu0 %v435
        %1320 = vmatpush1.msra.mxu0 %v434
        %1321 = vmatprep.subr.mxu0 %v437
        %1322 = vmatpush1.msra.mxu0 %v436
        %1323 = vmatprep.subr.mxu0 %v439
        %1324 = vmatpush1.msra.mxu0 %v438
        %1325 = vmatprep.subr.mxu0 %v441
        %1326 = vmatpush1.msra.mxu0 %v440
        %1327 = vmatprep.subr.mxu0 %v443
        %1328 = vmatpush1.msra.mxu0 %v442
        %1329 = vmatprep.subr.mxu0 %v445
        %1330 = vmatpush1.msra.mxu0 %v444
        %1331 = vmatprep.subr.mxu0 %v447
        %1332 = vmatpush1.msra.mxu0 %v446
        %1333 = vmatprep.subr.mxu0 %v449
        %1334 = vmatpush1.msra.mxu0 %v448
        %1335 = vmatprep.subr.mxu0 %v451
        %1336 = vmatpush1.msra.mxu0 %v450
        %1337 = vmatprep.subr.mxu0 %v453
        %1338 = vmatpush1.msra.mxu0 %v452
        %1339 = vmatprep.subr.mxu0 %v455
        %1340 = vmatpush1.msra.mxu0 %v454
        %1341 = vmatprep.subr.mxu0 %v457
        %1342 = vmatpush1.msra.mxu0 %v456
        %1343 = vmatprep.subr.mxu0 %v459
        %1344 = vmatpush1.msra.mxu0 %v458
        %1345 = vmatprep.subr.mxu0 0.0
        %1346 = vmatpush1.msra.mxu0 0.0
        %1347 = vmatprep.subr.mxu0 0.0
        %1348 = vmatpush1.msra.mxu0 0.0
        %1349 = vmatprep.subr.mxu0 0.0
        %1350 = vmatpush1.msra.mxu0 0.0
        %1351 = vmatprep.subr.mxu0 0.0
        %1352 = vmatpush1.msra.mxu0 0.0
        %1353 = vmatprep.subr.mxu0 0.0
        %1354 = vmatpush1.msra.mxu0 0.0
        %1355 = vmatprep.subr.mxu0 0.0
        %1356 = vmatpush1.msra.mxu0 0.0
        %1357 = vmatprep.subr.mxu0 0.0
        %1358 = vmatpush1.msra.mxu0 0.0
        %1359 = vmatprep.subr.mxu0 0.0
        %1360 = vmatpush1.msra.mxu0 0.0
        %1361 = vmatprep.subr.mxu0 0.0
        %1362 = vmatpush1.msra.mxu0 0.0
        %1363 = vmatprep.subr.mxu0 0.0
        %1364 = vmatpush1.msra.mxu0 0.0
        %1365 = vmatprep.subr.mxu0 0.0
        %1366 = vmatpush1.msra.mxu0 0.0
        %1367 = vmatprep.subr.mxu0 0.0
        %1368 = vmatpush1.msra.mxu0 0.0
        %1369 = vmatprep.subr.mxu0 0.0
        %1370 = vmatpush1.msra.mxu0 0.0
        %1371 = vmatprep.subr.mxu0 0.0
        %1372 = vmatpush1.msra.mxu0 0.0
        %1373 = vmatprep.subr.mxu0 0.0
        %1374 = vmatpush1.msra.mxu0 0.0
        %1375 = vmatprep.subr.mxu0 0.0
        %1376 = vmatpush1.msra.mxu0 0.0
        %1377 = vmatprep.mubr.f32.mxu0 0.0
        %1378 = vmatmul.mubr.f32.gmra.mrb[0].mxu0 %v975
        %v1379 = vpop.f32.mrb[0].mxu0
        %v1380 = vadd.f32 %v1219, %v1379
        %v1381 = vpop.f32.mrb[0].mxu0
        %v1382 = vadd.f32 %v1221, %v1381
        %1383 = vmatprep.mubr.f32.mxu0 0.0
        %1384 = vmatmul.mubr.f32.gmra.mrb[0].mxu0 %v976
        %v1385 = vpop.f32.mrb[0].mxu0
        %v1386 = vadd.f32 %v1225, %v1385
        %v1387 = vpop.f32.mrb[0].mxu0
        %v1388 = vadd.f32 %v1227, %v1387
        %1389 = vmatprep.mubr.f32.mxu0 0.0
        %1390 = vmatmul.mubr.f32.gmra.mrb[0].mxu0 %v977
        %v1391 = vpop.f32.mrb[0].mxu0
        %v1392 = vadd.f32 %v1231, %v1391
        %v1393 = vpop.f32.mrb[0].mxu0
        %v1394 = vadd.f32 %v1233, %v1393
        %1395 = vmatprep.mubr.f32.mxu0 0.0
        %1396 = vmatmul.mubr.f32.gmra.mrb[0].mxu0 %v978
        %v1397 = vpop.f32.mrb[0].mxu0
        %v1398 = vadd.f32 %v1237, %v1397
        %v1399 = vpop.f32.mrb[0].mxu0
        %v1400 = vadd.f32 %v1239, %v1399
        %1401 = vmatprep.mubr.f32.mxu0 0.0
        %1402 = vmatmul.mubr.f32.gmra.mrb[0].mxu0 %v979
        %v1403 = vpop.f32.mrb[0].mxu0
        %v1404 = vadd.f32 %v1243, %v1403
        %v1405 = vpop.f32.mrb[0].mxu0
        %v1406 = vadd.f32 %v1245, %v1405
        %1407 = vmatprep.mubr.f32.mxu0 0.0
        %1408 = vmatmul.mubr.f32.gmra.mrb[0].mxu0 %v980
        %v1409 = vpop.f32.mrb[0].mxu0
        %v1410 = vadd.f32 %v1249, %v1409
        %v1411 = vpop.f32.mrb[0].mxu0
        %v1412 = vadd.f32 %v1251, %v1411
        %1413 = vmatprep.mubr.f32.mxu0 0.0
        %1414 = vmatmul.mubr.f32.gmra.mrb[0].mxu0 %v981
        %v1415 = vpop.f32.mrb[0].mxu0
        %v1416 = vadd.f32 %v1255, %v1415
        %v1417 = vpop.f32.mrb[0].mxu0
        %v1418 = vadd.f32 %v1257, %v1417
        %1419 = vmatprep.mubr.f32.mxu0 0.0
        %1420 = vmatmul.mubr.f32.gmra.mrb[0].mxu0 %v982
        %v1421 = vpop.f32.mrb[0].mxu0
        %v1422 = vadd.f32 %v1261, %v1421
        %v1423 = vpop.f32.mrb[0].mxu0
        %v1424 = vadd.f32 %v1263, %v1423
        %1425 = vmatprep.mubr.f32.mxu0 0.0
        %1426 = vmatmul.mubr.f32.gmra.mrb[0].mxu0 %v983
        %v1427 = vpop.f32.mrb[0].mxu0
        %v1428 = vadd.f32 %v1267, %v1427
        %v1429 = vpop.f32.mrb[0].mxu0
        %v1430 = vadd.f32 %v1269, %v1429
        %1431 = vmatprep.mubr.f32.mxu0 0.0
        %1432 = vmatmul.mubr.f32.gmra.mrb[0].mxu0 %v984
        %v1433 = vpop.f32.mrb[0].mxu0
        %v1434 = vadd.f32 %v1273, %v1433
        %v1435 = vpop.f32.mrb[0].mxu0
        %v1436 = vadd.f32 %v1275, %v1435
        %1437 = vmatprep.mubr.f32.mxu0 0.0
        %1438 = vmatmul.mubr.f32.gmra.mrb[0].mxu0 %v985
        %v1439 = vpop.f32.mrb[0].mxu0
        %v1440 = vadd.f32 %v1279, %v1439
        %v1441 = vpop.f32.mrb[0].mxu0
        %v1442 = vadd.f32 %v1281, %v1441
        %1443 = vmatprep.mubr.f32.mxu0 0.0
        %1444 = vmatmul.mubr.f32.gmra.mrb[0].mxu0 %v986
        %v1445 = vpop.f32.mrb[0].mxu0
        %v1446 = vadd.f32 %v1285, %v1445
        %v1447 = vpop.f32.mrb[0].mxu0
        %v1448 = vadd.f32 %v1287, %v1447
        %1449 = vmatprep.mubr.f32.mxu0 0.0
        %1450 = vmatmul.mubr.f32.gmra.mrb[0].mxu0 %v987
        %v1451 = vpop.f32.mrb[0].mxu0
        %v1452 = vadd.f32 %v1291, %v1451
        %v1453 = vpop.f32.mrb[0].mxu0
        %v1454 = vadd.f32 %v1293, %v1453
        %1455 = vmatprep.mubr.f32.mxu0 0.0
        %1456 = vmatmul.mubr.f32.gmra.mrb[0].mxu0 %v988
        %v1457 = vpop.f32.mrb[0].mxu0
        %v1458 = vadd.f32 %v1297, %v1457
        %v1459 = vpop.f32.mrb[0].mxu0
        %v1460 = vadd.f32 %v1299, %v1459
        %1461 = vmatprep.mubr.f32.mxu0 0.0
        %1462 = vmatmul.mubr.f32.gmra.mrb[0].mxu0 %v989
        %v1463 = vpop.f32.mrb[0].mxu0
        %v1464 = vadd.f32 %v1303, %v1463
        %v1465 = vpop.f32.mrb[0].mxu0
        %v1466 = vadd.f32 %v1305, %v1465
        %1467 = vmatprep.mubr.f32.mxu0 0.0
        %1468 = vmatmul.mubr.f32.gmra.mrb[0].mxu0 %v990
        %v1469 = vpop.f32.mrb[0].mxu0
        %v1470 = vadd.f32 %v1309, %v1469
        %v1471 = vpop.f32.mrb[0].mxu0
        %v1472 = vadd.f32 %v1311, %v1471
        %1473 = vdwg.mxu0
        %v1474 = vmax.f32 %v1380, 0.0
        %v1475 = vmax.f32 %v1382, 0.0
        %v1476 = vmax.f32 %v1386, 0.0
        %v1477 = vmax.f32 %v1388, 0.0
        %v1478 = vmax.f32 %v1392, 0.0
        %v1479 = vmax.f32 %v1394, 0.0
        %v1480 = vmax.f32 %v1398, 0.0
        %v1481 = vmax.f32 %v1400, 0.0
        %v1482 = vmax.f32 %v1404, 0.0
        %v1483 = vmax.f32 %v1406, 0.0
        %v1484 = vmax.f32 %v1410, 0.0
        %v1485 = vmax.f32 %v1412, 0.0
        %v1486 = vmax.f32 %v1416, 0.0
        %v1487 = vmax.f32 %v1418, 0.0
        %v1488 = vmax.f32 %v1422, 0.0
        %v1489 = vmax.f32 %v1424, 0.0
        %v1490 = vmax.f32 %v1428, 0.0
        %v1491 = vmax.f32 %v1430, 0.0
        %v1492 = vmax.f32 %v1434, 0.0
        %v1493 = vmax.f32 %v1436, 0.0
        %v1494 = vmax.f32 %v1440, 0.0
        %v1495 = vmax.f32 %v1442, 0.0
        %v1496 = vmax.f32 %v1446, 0.0
        %v1497 = vmax.f32 %v1448, 0.0
        %v1498 = vmax.f32 %v1452, 0.0
        %v1499 = vmax.f32 %v1454, 0.0
        %v1500 = vmax.f32 %v1458, 0.0
        %v1501 = vmax.f32 %v1460, 0.0
        %v1502 = vmax.f32 %v1464, 0.0
        %v1503 = vmax.f32 %v1466, 0.0
        %v1504 = vmax.f32 %v1470, 0.0
        %v1505 = vmax.f32 %v1472, 0.0
        %v1506 = vmax.f32 %v943, %v1474
        %v1507 = vmax.f32 %v944, %v1475
        %v1508 = vmax.f32 %v945, %v1476
        %v1509 = vmax.f32 %v946, %v1477
        %v1510 = vmax.f32 %v947, %v1478
        %v1511 = vmax.f32 %v948, %v1479
        %v1512 = vmax.f32 %v949, %v1480
        %v1513 = vmax.f32 %v950, %v1481
        %v1514 = vmax.f32 %v951, %v1482
        %v1515 = vmax.f32 %v952, %v1483
        %v1516 = vmax.f32 %v953, %v1484
        %v1517 = vmax.f32 %v954, %v1485
        %v1518 = vmax.f32 %v955, %v1486
        %v1519 = vmax.f32 %v956, %v1487
        %v1520 = vmax.f32 %v957, %v1488
        %v1521 = vmax.f32 %v958, %v1489
        %v1522 = vmax.f32 %v959, %v1490
        %v1523 = vmax.f32 %v960, %v1491
        %v1524 = vmax.f32 %v961, %v1492
        %v1525 = vmax.f32 %v962, %v1493
        %v1526 = vmax.f32 %v963, %v1494
        %v1527 = vmax.f32 %v964, %v1495
        %v1528 = vmax.f32 %v965, %v1496
        %v1529 = vmax.f32 %v966, %v1497
        %v1530 = vmax.f32 %v967, %v1498
        %v1531 = vmax.f32 %v968, %v1499
        %v1532 = vmax.f32 %v969, %v1500
        %v1533 = vmax.f32 %v970, %v1501
        %v1534 = vmax.f32 %v971, %v1502
        %v1535 = vmax.f32 %v972, %v1503
        %v1536 = vmax.f32 %v973, %v1504
        %v1537 = vmax.f32 %v974, %v1505
        %v1538 = vmax.f32 %v1506, %v1507
        %v1539 = vmax.f32 %v1508, %v1509
        %v1540 = vmax.f32 %v1510, %v1511
        %v1541 = vmax.f32 %v1512, %v1513
        %v1542 = vmax.f32 %v1514, %v1515
        %v1543 = vmax.f32 %v1516, %v1517
        %v1544 = vmax.f32 %v1518, %v1519
        %v1545 = vmax.f32 %v1520, %v1521
        %v1546 = vmax.f32 %v1522, %v1523
        %v1547 = vmax.f32 %v1524, %v1525
        %v1548 = vmax.f32 %v1526, %v1527
        %v1549 = vmax.f32 %v1528, %v1529
        %v1550 = vmax.f32 %v1530, %v1531
        %v1551 = vmax.f32 %v1532, %v1533
        %v1552 = vmax.f32 %v1534, %v1535
        %v1553 = vmax.f32 %v1536, %v1537
        %v1554 = vld [vmem:[%s2] sm:$0xff]
        %v1555 = vld [vmem:[%s2 + $0x8] sm:$0xff]
        %v1556 = vld [vmem:[%s2 + $0x10] sm:$0xff]
        %v1557 = vld [vmem:[%s2 + $0x18] sm:$0xff]
        %v1558 = vld [vmem:[%s2 + $0x20] sm:$0xff]
        %v1559 = vld [vmem:[%s2 + $0x28] sm:$0xff]
        %v1560 = vld [vmem:[%s2 + $0x30] sm:$0xff]
        %v1561 = vld [vmem:[%s2 + $0x38] sm:$0xff]
        %v1562 = vld [vmem:[%s2 + $0x40] sm:$0xff]
        %v1563 = vld [vmem:[%s2 + $0x48] sm:$0xff]
        %v1564 = vld [vmem:[%s2 + $0x50] sm:$0xff]
        %v1565 = vld [vmem:[%s2 + $0x58] sm:$0xff]
        %v1566 = vld [vmem:[%s2 + $0x60] sm:$0xff]
        %v1567 = vld [vmem:[%s2 + $0x68] sm:$0xff]
        %v1568 = vld [vmem:[%s2 + $0x70] sm:$0xff]
        %v1569 = vld [vmem:[%s2 + $0x78] sm:$0xff]
        %s1570 = scalar_lea.vmem %s2, 128
        %v1571 = vld [vmem:[%s1570] sm:$0xff]
        %v1572 = vld [vmem:[%s1570 + $0x8] sm:$0xff]
        %v1573 = vld [vmem:[%s1570 + $0x10] sm:$0xff]
        %v1574 = vld [vmem:[%s1570 + $0x18] sm:$0xff]
        %v1575 = vld [vmem:[%s1570 + $0x20] sm:$0xff]
        %v1576 = vld [vmem:[%s1570 + $0x28] sm:$0xff]
        %v1577 = vld [vmem:[%s1570 + $0x30] sm:$0xff]
        %v1578 = vld [vmem:[%s1570 + $0x38] sm:$0xff]
        %v1579 = vld [vmem:[%s1570 + $0x40] sm:$0xff]
        %v1580 = vld [vmem:[%s1570 + $0x48] sm:$0xff]
        %v1581 = vld [vmem:[%s1570 + $0x50] sm:$0xff]
        %v1582 = vld [vmem:[%s1570 + $0x58] sm:$0xff]
        %v1583 = vld [vmem:[%s1570 + $0x60] sm:$0xff]
        %v1584 = vld [vmem:[%s1570 + $0x68] sm:$0xff]
        %v1585 = vld [vmem:[%s1570 + $0x70] sm:$0xff]
        %v1586 = vld [vmem:[%s1570 + $0x78] sm:$0xff]
        %1587 = vmatprep.subr.mxu0 0.0
        %1588 = vmatpush1.msra.mxu0 %v1571
        %1589 = vmatprep.subr.mxu0 0.0
        %1590 = vmatpush1.msra.mxu0 %v1572
        %1591 = vmatprep.subr.mxu0 0.0
        %1592 = vmatpush1.msra.mxu0 %v1573
        %1593 = vmatprep.subr.mxu0 0.0
        %1594 = vmatpush1.msra.mxu0 %v1574
        %1595 = vmatprep.subr.mxu0 0.0
        %1596 = vmatpush1.msra.mxu0 %v1575
        %1597 = vmatprep.subr.mxu0 0.0
        %1598 = vmatpush1.msra.mxu0 %v1576
        %1599 = vmatprep.subr.mxu0 0.0
        %1600 = vmatpush1.msra.mxu0 %v1577
        %1601 = vmatprep.subr.mxu0 0.0
        %1602 = vmatpush1.msra.mxu0 %v1578
        %1603 = vmatprep.subr.mxu0 0.0
        %1604 = vmatpush1.msra.mxu0 %v1579
        %1605 = vmatprep.subr.mxu0 0.0
        %1606 = vmatpush1.msra.mxu0 %v1580
        %1607 = vmatprep.subr.mxu0 0.0
        %1608 = vmatpush1.msra.mxu0 %v1581
        %1609 = vmatprep.subr.mxu0 0.0
        %1610 = vmatpush1.msra.mxu0 %v1582
        %1611 = vmatprep.subr.mxu0 0.0
        %1612 = vmatpush1.msra.mxu0 %v1583
        %1613 = vmatprep.subr.mxu0 0.0
        %1614 = vmatpush1.msra.mxu0 %v1584
        %1615 = vmatprep.subr.mxu0 0.0
        %1616 = vmatpush1.msra.mxu0 %v1585
        %1617 = vmatprep.subr.mxu0 0.0
        %1618 = vmatpush1.msra.mxu0 %v1586
        %1619 = vmatprep.subr.mxu0 0.0
        %1620 = vmatpush1.msra.mxu0 0.0
        %1621 = vmatprep.subr.mxu0 0.0
        %1622 = vmatpush1.msra.mxu0 0.0
        %1623 = vmatprep.subr.mxu0 0.0
        %1624 = vmatpush1.msra.mxu0 0.0
        %1625 = vmatprep.subr.mxu0 0.0
        %1626 = vmatpush1.msra.mxu0 0.0
        %1627 = vmatprep.subr.mxu0 0.0
        %1628 = vmatpush1.msra.mxu0 0.0
        %1629 = vmatprep.subr.mxu0 0.0
        %1630 = vmatpush1.msra.mxu0 0.0
        %1631 = vmatprep.subr.mxu0 0.0
        %1632 = vmatpush1.msra.mxu0 0.0
        %1633 = vmatprep.subr.mxu0 0.0
        %1634 = vmatpush1.msra.mxu0 0.0
        %1635 = vmatprep.subr.mxu0 0.0
        %1636 = vmatpush1.msra.mxu0 0.0
        %1637 = vmatprep.subr.mxu0 0.0
        %1638 = vmatpush1.msra.mxu0 0.0
        %1639 = vmatprep.subr.mxu0 0.0
        %1640 = vmatpush1.msra.mxu0 0.0
        %1641 = vmatprep.subr.mxu0 0.0
        %1642 = vmatpush1.msra.mxu0 0.0
        %1643 = vmatprep.subr.mxu0 0.0
        %1644 = vmatpush1.msra.mxu0 0.0
        %1645 = vmatprep.subr.mxu0 0.0
        %1646 = vmatpush1.msra.mxu0 0.0
        %1647 = vmatprep.subr.mxu0 0.0
        %1648 = vmatpush1.msra.mxu0 0.0
        %1649 = vmatprep.subr.mxu0 0.0
        %1650 = vmatpush1.msra.mxu0 0.0
        %1651 = vmatprep.mubr.f32.mxu0 0.0
        %1652 = vmatmul.mubr.f32.gmra.mrb[0].mxu0 %v1539
        %v1653 = vpop.f32.mrb[0].mxu0
        %v1654 = vadd.f32 0.0, %v1653
        %v1655 = vpop.f32.mrb[0].mxu0
        %1656 = vmatprep.mubr.f32.mxu0 0.0
        %1657 = vmatmul.mubr.f32.gmra.mrb[0].mxu0 %v1540
        %v1658 = vpop.f32.mrb[0].mxu0
        %v1659 = vadd.f32 0.0, %v1658
        %v1660 = vpop.f32.mrb[0].mxu0
        %1661 = vmatprep.mubr.f32.mxu0 0.0
        %1662 = vmatmul.mubr.f32.gmra.mrb[0].mxu0 %v1541
        %v1663 = vpop.f32.mrb[0].mxu0
        %v1664 = vadd.f32 0.0, %v1663
        %v1665 = vpop.f32.mrb[0].mxu0
        %1666 = vmatprep.mubr.f32.mxu0 0.0
        %1667 = vmatmul.mubr.f32.gmra.mrb[0].mxu0 %v1542
        %v1668 = vpop.f32.mrb[0].mxu0
        %v1669 = vadd.f32 0.0, %v1668
        %v1670 = vpop.f32.mrb[0].mxu0
        %1671 = vmatprep.mubr.f32.mxu0 0.0
        %1672 = vmatmul.mubr.f32.gmra.mrb[0].mxu0 %v1543
        %v1673 = vpop.f32.mrb[0].mxu0
        %v1674 = vadd.f32 0.0, %v1673
        %v1675 = vpop.f32.mrb[0].mxu0
        %1676 = vmatprep.mubr.f32.mxu0 0.0
        %1677 = vmatmul.mubr.f32.gmra.mrb[0].mxu0 %v1544
        %v1678 = vpop.f32.mrb[0].mxu0
        %v1679 = vadd.f32 0.0, %v1678
        %v1680 = vpop.f32.mrb[0].mxu0
        %1681 = vmatprep.mubr.f32.mxu0 0.0
        %1682 = vmatmul.mubr.f32.gmra.mrb[0].mxu0 %v1545
        %v1683 = vpop.f32.mrb[0].mxu0
        %v1684 = vadd.f32 0.0, %v1683
        %v1685 = vpop.f32.mrb[0].mxu0
        %1686 = vmatprep.mubr.f32.mxu0 0.0
        %1687 = vmatmul.mubr.f32.gmra.mrb[0].mxu0 %v1546
        %v1688 = vpop.f32.mrb[0].mxu0
        %v1689 = vadd.f32 0.0, %v1688
        %v1690 = vpop.f32.mrb[0].mxu0
        %1691 = vmatprep.mubr.f32.mxu0 0.0
        %1692 = vmatmul.mubr.f32.gmra.mrb[0].mxu0 %v1547
        %v1693 = vpop.f32.mrb[0].mxu0
        %v1694 = vadd.f32 0.0, %v1693
        %v1695 = vpop.f32.mrb[0].mxu0
        %1696 = vmatprep.mubr.f32.mxu0 0.0
        %1697 = vmatmul.mubr.f32.gmra.mrb[0].mxu0 %v1548
        %v1698 = vpop.f32.mrb[0].mxu0
        %v1699 = vadd.f32 0.0, %v1698
        %v1700 = vpop.f32.mrb[0].mxu0
        %1701 = vmatprep.mubr.f32.mxu0 0.0
        %1702 = vmatmul.mubr.f32.gmra.mrb[0].mxu0 %v1549
        %v1703 = vpop.f32.mrb[0].mxu0
        %v1704 = vadd.f32 0.0, %v1703
        %v1705 = vpop.f32.mrb[0].mxu0
        %1706 = vmatprep.mubr.f32.mxu0 0.0
        %1707 = vmatmul.mubr.f32.gmra.mrb[0].mxu0 %v1550
        %v1708 = vpop.f32.mrb[0].mxu0
        %v1709 = vadd.f32 0.0, %v1708
        %v1710 = vpop.f32.mrb[0].mxu0
        %1711 = vdwg.mxu0
        %1712 = vmatprep.subr.mxu0 0.0
        %1713 = vmatpush1.msra.mxu0 %v1554
        %1714 = vmatprep.subr.mxu0 0.0
        %1715 = vmatpush1.msra.mxu0 %v1555
        %1716 = vmatprep.subr.mxu0 0.0
        %1717 = vmatpush1.msra.mxu0 %v1556
        %1718 = vmatprep.subr.mxu0 0.0
        %1719 = vmatpush1.msra.mxu0 %v1557
        %1720 = vmatprep.subr.mxu0 0.0
        %1721 = vmatpush1.msra.mxu0 %v1558
        %1722 = vmatprep.subr.mxu0 0.0
        %1723 = vmatpush1.msra.mxu0 %v1559
        %1724 = vmatprep.subr.mxu0 0.0
        %1725 = vmatpush1.msra.mxu0 %v1560
        %1726 = vmatprep.subr.mxu0 0.0
        %1727 = vmatpush1.msra.mxu0 %v1561
        %1728 = vmatprep.subr.mxu0 0.0
        %1729 = vmatpush1.msra.mxu0 %v1562
        %1730 = vmatprep.subr.mxu0 0.0
        %1731 = vmatpush1.msra.mxu0 %v1563
        %1732 = vmatprep.subr.mxu0 0.0
        %1733 = vmatpush1.msra.mxu0 %v1564
        %1734 = vmatprep.subr.mxu0 0.0
        %1735 = vmatpush1.msra.mxu0 %v1565
        %1736 = vmatprep.subr.mxu0 0.0
        %1737 = vmatpush1.msra.mxu0 %v1566
        %1738 = vmatprep.subr.mxu0 0.0
        %1739 = vmatpush1.msra.mxu0 %v1567
        %1740 = vmatprep.subr.mxu0 0.0
        %1741 = vmatpush1.msra.mxu0 %v1568
        %1742 = vmatprep.subr.mxu0 0.0
        %1743 = vmatpush1.msra.mxu0 %v1569
        %1744 = vmatprep.subr.mxu0 0.0
        %1745 = vmatpush1.msra.mxu0 0.0
        %1746 = vmatprep.subr.mxu0 0.0
        %1747 = vmatpush1.msra.mxu0 0.0
        %1748 = vmatprep.subr.mxu0 0.0
        %1749 = vmatpush1.msra.mxu0 0.0
        %1750 = vmatprep.subr.mxu0 0.0
        %1751 = vmatpush1.msra.mxu0 0.0
        %1752 = vmatprep.subr.mxu0 0.0
        %1753 = vmatpush1.msra.mxu0 0.0
        %1754 = vmatprep.subr.mxu0 0.0
        %1755 = vmatpush1.msra.mxu0 0.0
        %1756 = vmatprep.subr.mxu0 0.0
        %1757 = vmatpush1.msra.mxu0 0.0
        %1758 = vmatprep.subr.mxu0 0.0
        %1759 = vmatpush1.msra.mxu0 0.0
        %1760 = vmatprep.subr.mxu0 0.0
        %1761 = vmatpush1.msra.mxu0 0.0
        %1762 = vmatprep.subr.mxu0 0.0
        %1763 = vmatpush1.msra.mxu0 0.0
        %1764 = vmatprep.subr.mxu0 0.0
        %1765 = vmatpush1.msra.mxu0 0.0
        %1766 = vmatprep.subr.mxu0 0.0
        %1767 = vmatpush1.msra.mxu0 0.0
        %1768 = vmatprep.subr.mxu0 0.0
        %1769 = vmatpush1.msra.mxu0 0.0
        %1770 = vmatprep.subr.mxu0 0.0
        %1771 = vmatpush1.msra.mxu0 0.0
        %1772 = vmatprep.subr.mxu0 0.0
        %1773 = vmatpush1.msra.mxu0 0.0
        %1774 = vmatprep.subr.mxu0 0.0
        %1775 = vmatpush1.msra.mxu0 0.0
        %1776 = vmatprep.mubr.f32.mxu0 0.0
        %1777 = vmatmul.mubr.f32.gmra.mrb[0].mxu0 %v1538
        %v1778 = vpop.f32.mrb[0].mxu0
        %v1779 = vadd.f32 %v1654, %v1778
        %v1780 = vpop.f32.mrb[0].mxu0
        %1781 = vmatprep.mubr.f32.mxu0 0.0
        %1782 = vmatmul.mubr.f32.gmra.mrb[0].mxu0 %v1539
        %v1783 = vpop.f32.mrb[0].mxu0
        %v1784 = vadd.f32 %v1659, %v1783
        %v1785 = vpop.f32.mrb[0].mxu0
        %1786 = vmatprep.mubr.f32.mxu0 0.0
        %1787 = vmatmul.mubr.f32.gmra.mrb[0].mxu0 %v1540
        %v1788 = vpop.f32.mrb[0].mxu0
        %v1789 = vadd.f32 %v1664, %v1788
        %v1790 = vpop.f32.mrb[0].mxu0
        %1791 = vmatprep.mubr.f32.mxu0 0.0
        %1792 = vmatmul.mubr.f32.gmra.mrb[0].mxu0 %v1541
        %v1793 = vpop.f32.mrb[0].mxu0
        %v1794 = vadd.f32 %v1669, %v1793
        %v1795 = vpop.f32.mrb[0].mxu0
        %1796 = vmatprep.mubr.f32.mxu0 0.0
        %1797 = vmatmul.mubr.f32.gmra.mrb[0].mxu0 %v1542
        %v1798 = vpop.f32.mrb[0].mxu0
        %v1799 = vadd.f32 %v1674, %v1798
        %v1800 = vpop.f32.mrb[0].mxu0
        %1801 = vmatprep.mubr.f32.mxu0 0.0
        %1802 = vmatmul.mubr.f32.gmra.mrb[0].mxu0 %v1543
        %v1803 = vpop.f32.mrb[0].mxu0
        %v1804 = vadd.f32 %v1679, %v1803
        %v1805 = vpop.f32.mrb[0].mxu0
        %1806 = vmatprep.mubr.f32.mxu0 0.0
        %1807 = vmatmul.mubr.f32.gmra.mrb[0].mxu0 %v1544
        %v1808 = vpop.f32.mrb[0].mxu0
        %v1809 = vadd.f32 %v1684, %v1808
        %v1810 = vpop.f32.mrb[0].mxu0
        %1811 = vmatprep.mubr.f32.mxu0 0.0
        %1812 = vmatmul.mubr.f32.gmra.mrb[0].mxu0 %v1545
        %v1813 = vpop.f32.mrb[0].mxu0
        %v1814 = vadd.f32 %v1689, %v1813
        %v1815 = vpop.f32.mrb[0].mxu0
        %1816 = vmatprep.mubr.f32.mxu0 0.0
        %1817 = vmatmul.mubr.f32.gmra.mrb[0].mxu0 %v1546
        %v1818 = vpop.f32.mrb[0].mxu0
        %v1819 = vadd.f32 %v1694, %v1818
        %v1820 = vpop.f32.mrb[0].mxu0
        %1821 = vmatprep.mubr.f32.mxu0 0.0
        %1822 = vmatmul.mubr.f32.gmra.mrb[0].mxu0 %v1547
        %v1823 = vpop.f32.mrb[0].mxu0
        %v1824 = vadd.f32 %v1699, %v1823
        %v1825 = vpop.f32.mrb[0].mxu0
        %1826 = vmatprep.mubr.f32.mxu0 0.0
        %1827 = vmatmul.mubr.f32.gmra.mrb[0].mxu0 %v1548
        %v1828 = vpop.f32.mrb[0].mxu0
        %v1829 = vadd.f32 %v1704, %v1828
        %v1830 = vpop.f32.mrb[0].mxu0
        %1831 = vmatprep.mubr.f32.mxu0 0.0
        %1832 = vmatmul.mubr.f32.gmra.mrb[0].mxu0 %v1549
        %v1833 = vpop.f32.mrb[0].mxu0
        %v1834 = vadd.f32 %v1709, %v1833
        %v1835 = vpop.f32.mrb[0].mxu0
        %1836 = vdwg.mxu0
        %s1837 = scalar_lea.vmem %s2, 256
        %v1838 = vld [vmem:[%s1837] sm:$0xff]
        %v1839 = vld [vmem:[%s1837 + $0x8] sm:$0xff]
        %v1840 = vld [vmem:[%s1837 + $0x10] sm:$0xff]
        %v1841 = vld [vmem:[%s1837 + $0x18] sm:$0xff]
        %v1842 = vld [vmem:[%s1837 + $0x20] sm:$0xff]
        %v1843 = vld [vmem:[%s1837 + $0x28] sm:$0xff]
        %v1844 = vld [vmem:[%s1837 + $0x30] sm:$0xff]
        %v1845 = vld [vmem:[%s1837 + $0x38] sm:$0xff]
        %v1846 = vld [vmem:[%s1837 + $0x40] sm:$0xff]
        %v1847 = vld [vmem:[%s1837 + $0x48] sm:$0xff]
        %v1848 = vld [vmem:[%s1837 + $0x50] sm:$0xff]
        %v1849 = vld [vmem:[%s1837 + $0x58] sm:$0xff]
        %v1850 = vld [vmem:[%s1837 + $0x60] sm:$0xff]
        %v1851 = vld [vmem:[%s1837 + $0x68] sm:$0xff]
        %v1852 = vld [vmem:[%s1837 + $0x70] sm:$0xff]
        %v1853 = vld [vmem:[%s1837 + $0x78] sm:$0xff]
        %1854 = vmatprep.subr.mxu0 0.0
        %1855 = vmatpush1.msra.mxu0 %v1838
        %1856 = vmatprep.subr.mxu0 0.0
        %1857 = vmatpush1.msra.mxu0 %v1839
        %1858 = vmatprep.subr.mxu0 0.0
        %1859 = vmatpush1.msra.mxu0 %v1840
        %1860 = vmatprep.subr.mxu0 0.0
        %1861 = vmatpush1.msra.mxu0 %v1841
        %1862 = vmatprep.subr.mxu0 0.0
        %1863 = vmatpush1.msra.mxu0 %v1842
        %1864 = vmatprep.subr.mxu0 0.0
        %1865 = vmatpush1.msra.mxu0 %v1843
        %1866 = vmatprep.subr.mxu0 0.0
        %1867 = vmatpush1.msra.mxu0 %v1844
        %1868 = vmatprep.subr.mxu0 0.0
        %1869 = vmatpush1.msra.mxu0 %v1845
        %1870 = vmatprep.subr.mxu0 0.0
        %1871 = vmatpush1.msra.mxu0 %v1846
        %1872 = vmatprep.subr.mxu0 0.0
        %1873 = vmatpush1.msra.mxu0 %v1847
        %1874 = vmatprep.subr.mxu0 0.0
        %1875 = vmatpush1.msra.mxu0 %v1848
        %1876 = vmatprep.subr.mxu0 0.0
        %1877 = vmatpush1.msra.mxu0 %v1849
        %1878 = vmatprep.subr.mxu0 0.0
        %1879 = vmatpush1.msra.mxu0 %v1850
        %1880 = vmatprep.subr.mxu0 0.0
        %1881 = vmatpush1.msra.mxu0 %v1851
        %1882 = vmatprep.subr.mxu0 0.0
        %1883 = vmatpush1.msra.mxu0 %v1852
        %1884 = vmatprep.subr.mxu0 0.0
        %1885 = vmatpush1.msra.mxu0 %v1853
        %1886 = vmatprep.subr.mxu0 0.0
        %1887 = vmatpush1.msra.mxu0 0.0
        %1888 = vmatprep.subr.mxu0 0.0
        %1889 = vmatpush1.msra.mxu0 0.0
        %1890 = vmatprep.subr.mxu0 0.0
        %1891 = vmatpush1.msra.mxu0 0.0
        %1892 = vmatprep.subr.mxu0 0.0
        %1893 = vmatpush1.msra.mxu0 0.0
        %1894 = vmatprep.subr.mxu0 0.0
        %1895 = vmatpush1.msra.mxu0 0.0
        %1896 = vmatprep.subr.mxu0 0.0
        %1897 = vmatpush1.msra.mxu0 0.0
        %1898 = vmatprep.subr.mxu0 0.0
        %1899 = vmatpush1.msra.mxu0 0.0
        %1900 = vmatprep.subr.mxu0 0.0
        %1901 = vmatpush1.msra.mxu0 0.0
        %1902 = vmatprep.subr.mxu0 0.0
        %1903 = vmatpush1.msra.mxu0 0.0
        %1904 = vmatprep.subr.mxu0 0.0
        %1905 = vmatpush1.msra.mxu0 0.0
        %1906 = vmatprep.subr.mxu0 0.0
        %1907 = vmatpush1.msra.mxu0 0.0
        %1908 = vmatprep.subr.mxu0 0.0
        %1909 = vmatpush1.msra.mxu0 0.0
        %1910 = vmatprep.subr.mxu0 0.0
        %1911 = vmatpush1.msra.mxu0 0.0
        %1912 = vmatprep.subr.mxu0 0.0
        %1913 = vmatpush1.msra.mxu0 0.0
        %1914 = vmatprep.subr.mxu0 0.0
        %1915 = vmatpush1.msra.mxu0 0.0
        %1916 = vmatprep.subr.mxu0 0.0
        %1917 = vmatpush1.msra.mxu0 0.0
        %1918 = vmatprep.mubr.f32.mxu0 0.0
        %1919 = vmatmul.mubr.f32.gmra.mrb[0].mxu0 %v1540
        %v1920 = vpop.f32.mrb[0].mxu0
        %v1921 = vadd.f32 0.0, %v1920
        %v1922 = vpop.f32.mrb[0].mxu0
        %1923 = vmatprep.mubr.f32.mxu0 0.0
        %1924 = vmatmul.mubr.f32.gmra.mrb[0].mxu0 %v1541
        %v1925 = vpop.f32.mrb[0].mxu0
        %v1926 = vadd.f32 0.0, %v1925
        %v1927 = vpop.f32.mrb[0].mxu0
        %1928 = vmatprep.mubr.f32.mxu0 0.0
        %1929 = vmatmul.mubr.f32.gmra.mrb[0].mxu0 %v1542
        %v1930 = vpop.f32.mrb[0].mxu0
        %v1931 = vadd.f32 0.0, %v1930
        %v1932 = vpop.f32.mrb[0].mxu0
        %1933 = vmatprep.mubr.f32.mxu0 0.0
        %1934 = vmatmul.mubr.f32.gmra.mrb[0].mxu0 %v1543
        %v1935 = vpop.f32.mrb[0].mxu0
        %v1936 = vadd.f32 0.0, %v1935
        %v1937 = vpop.f32.mrb[0].mxu0
        %1938 = vmatprep.mubr.f32.mxu0 0.0
        %1939 = vmatmul.mubr.f32.gmra.mrb[0].mxu0 %v1544
        %v1940 = vpop.f32.mrb[0].mxu0
        %v1941 = vadd.f32 0.0, %v1940
        %v1942 = vpop.f32.mrb[0].mxu0
        %1943 = vmatprep.mubr.f32.mxu0 0.0
        %1944 = vmatmul.mubr.f32.gmra.mrb[0].mxu0 %v1545
        %v1945 = vpop.f32.mrb[0].mxu0
        %v1946 = vadd.f32 0.0, %v1945
        %v1947 = vpop.f32.mrb[0].mxu0
        %1948 = vmatprep.mubr.f32.mxu0 0.0
        %1949 = vmatmul.mubr.f32.gmra.mrb[0].mxu0 %v1546
        %v1950 = vpop.f32.mrb[0].mxu0
        %v1951 = vadd.f32 0.0, %v1950
        %v1952 = vpop.f32.mrb[0].mxu0
        %1953 = vmatprep.mubr.f32.mxu0 0.0
        %1954 = vmatmul.mubr.f32.gmra.mrb[0].mxu0 %v1547
        %v1955 = vpop.f32.mrb[0].mxu0
        %v1956 = vadd.f32 0.0, %v1955
        %v1957 = vpop.f32.mrb[0].mxu0
        %1958 = vmatprep.mubr.f32.mxu0 0.0
        %1959 = vmatmul.mubr.f32.gmra.mrb[0].mxu0 %v1548
        %v1960 = vpop.f32.mrb[0].mxu0
        %v1961 = vadd.f32 0.0, %v1960
        %v1962 = vpop.f32.mrb[0].mxu0
        %1963 = vmatprep.mubr.f32.mxu0 0.0
        %1964 = vmatmul.mubr.f32.gmra.mrb[0].mxu0 %v1549
        %v1965 = vpop.f32.mrb[0].mxu0
        %v1966 = vadd.f32 0.0, %v1965
        %v1967 = vpop.f32.mrb[0].mxu0
        %1968 = vmatprep.mubr.f32.mxu0 0.0
        %1969 = vmatmul.mubr.f32.gmra.mrb[0].mxu0 %v1550
        %v1970 = vpop.f32.mrb[0].mxu0
        %v1971 = vadd.f32 0.0, %v1970
        %v1972 = vpop.f32.mrb[0].mxu0
        %1973 = vmatprep.mubr.f32.mxu0 0.0
        %1974 = vmatmul.mubr.f32.gmra.mrb[0].mxu0 %v1551
        %v1975 = vpop.f32.mrb[0].mxu0
        %v1976 = vadd.f32 0.0, %v1975
        %v1977 = vpop.f32.mrb[0].mxu0
        %1978 = vdwg.mxu0
        %v1979 = vadd.f32 %v1779, %v1921
        %v1980 = vadd.f32 %v1784, %v1926
        %v1981 = vadd.f32 %v1789, %v1931
        %v1982 = vadd.f32 %v1794, %v1936
        %v1983 = vadd.f32 %v1799, %v1941
        %v1984 = vadd.f32 %v1804, %v1946
        %v1985 = vadd.f32 %v1809, %v1951
        %v1986 = vadd.f32 %v1814, %v1956
        %v1987 = vadd.f32 %v1819, %v1961
        %v1988 = vadd.f32 %v1824, %v1966
        %v1989 = vadd.f32 %v1829, %v1971
        %v1990 = vadd.f32 %v1834, %v1976
        %s1991 = scalar_lea.vmem %s2, 384
        %v1992 = vld [vmem:[%s1991] sm:$0xff]
        %v1993 = vld [vmem:[%s1991 + $0x8] sm:$0xff]
        %v1994 = vld [vmem:[%s1991 + $0x10] sm:$0xff]
        %v1995 = vld [vmem:[%s1991 + $0x18] sm:$0xff]
        %v1996 = vld [vmem:[%s1991 + $0x20] sm:$0xff]
        %v1997 = vld [vmem:[%s1991 + $0x28] sm:$0xff]
        %v1998 = vld [vmem:[%s1991 + $0x30] sm:$0xff]
        %v1999 = vld [vmem:[%s1991 + $0x38] sm:$0xff]
        %v2000 = vld [vmem:[%s1991 + $0x40] sm:$0xff]
        %v2001 = vld [vmem:[%s1991 + $0x48] sm:$0xff]
        %v2002 = vld [vmem:[%s1991 + $0x50] sm:$0xff]
        %v2003 = vld [vmem:[%s1991 + $0x58] sm:$0xff]
        %v2004 = vld [vmem:[%s1991 + $0x60] sm:$0xff]
        %v2005 = vld [vmem:[%s1991 + $0x68] sm:$0xff]
        %v2006 = vld [vmem:[%s1991 + $0x70] sm:$0xff]
        %v2007 = vld [vmem:[%s1991 + $0x78] sm:$0xff]
        %2008 = vmatprep.subr.mxu0 0.0
        %2009 = vmatpush1.msra.mxu0 %v1992
        %2010 = vmatprep.subr.mxu0 0.0
        %2011 = vmatpush1.msra.mxu0 %v1993
        %2012 = vmatprep.subr.mxu0 0.0
        %2013 = vmatpush1.msra.mxu0 %v1994
        %2014 = vmatprep.subr.mxu0 0.0
        %2015 = vmatpush1.msra.mxu0 %v1995
        %2016 = vmatprep.subr.mxu0 0.0
        %2017 = vmatpush1.msra.mxu0 %v1996
        %2018 = vmatprep.subr.mxu0 0.0
        %2019 = vmatpush1.msra.mxu0 %v1997
        %2020 = vmatprep.subr.mxu0 0.0
        %2021 = vmatpush1.msra.mxu0 %v1998
        %2022 = vmatprep.subr.mxu0 0.0
        %2023 = vmatpush1.msra.mxu0 %v1999
        %2024 = vmatprep.subr.mxu0 0.0
        %2025 = vmatpush1.msra.mxu0 %v2000
        %2026 = vmatprep.subr.mxu0 0.0
        %2027 = vmatpush1.msra.mxu0 %v2001
        %2028 = vmatprep.subr.mxu0 0.0
        %2029 = vmatpush1.msra.mxu0 %v2002
        %2030 = vmatprep.subr.mxu0 0.0
        %2031 = vmatpush1.msra.mxu0 %v2003
        %2032 = vmatprep.subr.mxu0 0.0
        %2033 = vmatpush1.msra.mxu0 %v2004
        %2034 = vmatprep.subr.mxu0 0.0
        %2035 = vmatpush1.msra.mxu0 %v2005
        %2036 = vmatprep.subr.mxu0 0.0
        %2037 = vmatpush1.msra.mxu0 %v2006
        %2038 = vmatprep.subr.mxu0 0.0
        %2039 = vmatpush1.msra.mxu0 %v2007
        %2040 = vmatprep.subr.mxu0 0.0
        %2041 = vmatpush1.msra.mxu0 0.0
        %2042 = vmatprep.subr.mxu0 0.0
        %2043 = vmatpush1.msra.mxu0 0.0
        %2044 = vmatprep.subr.mxu0 0.0
        %2045 = vmatpush1.msra.mxu0 0.0
        %2046 = vmatprep.subr.mxu0 0.0
        %2047 = vmatpush1.msra.mxu0 0.0
        %2048 = vmatprep.subr.mxu0 0.0
        %2049 = vmatpush1.msra.mxu0 0.0
        %2050 = vmatprep.subr.mxu0 0.0
        %2051 = vmatpush1.msra.mxu0 0.0
        %2052 = vmatprep.subr.mxu0 0.0
        %2053 = vmatpush1.msra.mxu0 0.0
        %2054 = vmatprep.subr.mxu0 0.0
        %2055 = vmatpush1.msra.mxu0 0.0
        %2056 = vmatprep.subr.mxu0 0.0
        %2057 = vmatpush1.msra.mxu0 0.0
        %2058 = vmatprep.subr.mxu0 0.0
        %2059 = vmatpush1.msra.mxu0 0.0
        %2060 = vmatprep.subr.mxu0 0.0
        %2061 = vmatpush1.msra.mxu0 0.0
        %2062 = vmatprep.subr.mxu0 0.0
        %2063 = vmatpush1.msra.mxu0 0.0
        %2064 = vmatprep.subr.mxu0 0.0
        %2065 = vmatpush1.msra.mxu0 0.0
        %2066 = vmatprep.subr.mxu0 0.0
        %2067 = vmatpush1.msra.mxu0 0.0
        %2068 = vmatprep.subr.mxu0 0.0
        %2069 = vmatpush1.msra.mxu0 0.0
        %2070 = vmatprep.subr.mxu0 0.0
        %2071 = vmatpush1.msra.mxu0 0.0
        %2072 = vmatprep.mubr.f32.mxu0 0.0
        %2073 = vmatmul.mubr.f32.gmra.mrb[0].mxu0 %v1541
        %v2074 = vpop.f32.mrb[0].mxu0
        %v2075 = vadd.f32 0.0, %v2074
        %v2076 = vpop.f32.mrb[0].mxu0
        %2077 = vmatprep.mubr.f32.mxu0 0.0
        %2078 = vmatmul.mubr.f32.gmra.mrb[0].mxu0 %v1542
        %v2079 = vpop.f32.mrb[0].mxu0
        %v2080 = vadd.f32 0.0, %v2079
        %v2081 = vpop.f32.mrb[0].mxu0
        %2082 = vmatprep.mubr.f32.mxu0 0.0
        %2083 = vmatmul.mubr.f32.gmra.mrb[0].mxu0 %v1543
        %v2084 = vpop.f32.mrb[0].mxu0
        %v2085 = vadd.f32 0.0, %v2084
        %v2086 = vpop.f32.mrb[0].mxu0
        %2087 = vmatprep.mubr.f32.mxu0 0.0
        %2088 = vmatmul.mubr.f32.gmra.mrb[0].mxu0 %v1544
        %v2089 = vpop.f32.mrb[0].mxu0
        %v2090 = vadd.f32 0.0, %v2089
        %v2091 = vpop.f32.mrb[0].mxu0
        %2092 = vmatprep.mubr.f32.mxu0 0.0
        %2093 = vmatmul.mubr.f32.gmra.mrb[0].mxu0 %v1545
        %v2094 = vpop.f32.mrb[0].mxu0
        %v2095 = vadd.f32 0.0, %v2094
        %v2096 = vpop.f32.mrb[0].mxu0
        %2097 = vmatprep.mubr.f32.mxu0 0.0
        %2098 = vmatmul.mubr.f32.gmra.mrb[0].mxu0 %v1546
        %v2099 = vpop.f32.mrb[0].mxu0
        %v2100 = vadd.f32 0.0, %v2099
        %v2101 = vpop.f32.mrb[0].mxu0
        %2102 = vmatprep.mubr.f32.mxu0 0.0
        %2103 = vmatmul.mubr.f32.gmra.mrb[0].mxu0 %v1547
        %v2104 = vpop.f32.mrb[0].mxu0
        %v2105 = vadd.f32 0.0, %v2104
        %v2106 = vpop.f32.mrb[0].mxu0
        %2107 = vmatprep.mubr.f32.mxu0 0.0
        %2108 = vmatmul.mubr.f32.gmra.mrb[0].mxu0 %v1548
        %v2109 = vpop.f32.mrb[0].mxu0
        %v2110 = vadd.f32 0.0, %v2109
        %v2111 = vpop.f32.mrb[0].mxu0
        %2112 = vmatprep.mubr.f32.mxu0 0.0
        %2113 = vmatmul.mubr.f32.gmra.mrb[0].mxu0 %v1549
        %v2114 = vpop.f32.mrb[0].mxu0
        %v2115 = vadd.f32 0.0, %v2114
        %v2116 = vpop.f32.mrb[0].mxu0
        %2117 = vmatprep.mubr.f32.mxu0 0.0
        %2118 = vmatmul.mubr.f32.gmra.mrb[0].mxu0 %v1550
        %v2119 = vpop.f32.mrb[0].mxu0
        %v2120 = vadd.f32 0.0, %v2119
        %v2121 = vpop.f32.mrb[0].mxu0
        %2122 = vmatprep.mubr.f32.mxu0 0.0
        %2123 = vmatmul.mubr.f32.gmra.mrb[0].mxu0 %v1551
        %v2124 = vpop.f32.mrb[0].mxu0
        %v2125 = vadd.f32 0.0, %v2124
        %v2126 = vpop.f32.mrb[0].mxu0
        %2127 = vmatprep.mubr.f32.mxu0 0.0
        %2128 = vmatmul.mubr.f32.gmra.mrb[0].mxu0 %v1552
        %v2129 = vpop.f32.mrb[0].mxu0
        %v2130 = vadd.f32 0.0, %v2129
        %v2131 = vpop.f32.mrb[0].mxu0
        %2132 = vdwg.mxu0
        %v2133 = vadd.f32 %v1979, %v2075
        %v2134 = vadd.f32 %v1980, %v2080
        %v2135 = vadd.f32 %v1981, %v2085
        %v2136 = vadd.f32 %v1982, %v2090
        %v2137 = vadd.f32 %v1983, %v2095
        %v2138 = vadd.f32 %v1984, %v2100
        %v2139 = vadd.f32 %v1985, %v2105
        %v2140 = vadd.f32 %v1986, %v2110
        %v2141 = vadd.f32 %v1987, %v2115
        %v2142 = vadd.f32 %v1988, %v2120
        %v2143 = vadd.f32 %v1989, %v2125
        %v2144 = vadd.f32 %v1990, %v2130
        %s2145 = scalar_lea.vmem %s2, 512
        %v2146 = vld [vmem:[%s2145] sm:$0xff]
        %v2147 = vld [vmem:[%s2145 + $0x8] sm:$0xff]
        %v2148 = vld [vmem:[%s2145 + $0x10] sm:$0xff]
        %v2149 = vld [vmem:[%s2145 + $0x18] sm:$0xff]
        %v2150 = vld [vmem:[%s2145 + $0x20] sm:$0xff]
        %v2151 = vld [vmem:[%s2145 + $0x28] sm:$0xff]
        %v2152 = vld [vmem:[%s2145 + $0x30] sm:$0xff]
        %v2153 = vld [vmem:[%s2145 + $0x38] sm:$0xff]
        %v2154 = vld [vmem:[%s2145 + $0x40] sm:$0xff]
        %v2155 = vld [vmem:[%s2145 + $0x48] sm:$0xff]
        %v2156 = vld [vmem:[%s2145 + $0x50] sm:$0xff]
        %v2157 = vld [vmem:[%s2145 + $0x58] sm:$0xff]
        %v2158 = vld [vmem:[%s2145 + $0x60] sm:$0xff]
        %v2159 = vld [vmem:[%s2145 + $0x68] sm:$0xff]
        %v2160 = vld [vmem:[%s2145 + $0x70] sm:$0xff]
        %v2161 = vld [vmem:[%s2145 + $0x78] sm:$0xff]
        %2162 = vmatprep.subr.mxu0 0.0
        %2163 = vmatpush1.msra.mxu0 %v2146
        %2164 = vmatprep.subr.mxu0 0.0
        %2165 = vmatpush1.msra.mxu0 %v2147
        %2166 = vmatprep.subr.mxu0 0.0
        %2167 = vmatpush1.msra.mxu0 %v2148
        %2168 = vmatprep.subr.mxu0 0.0
        %2169 = vmatpush1.msra.mxu0 %v2149
        %2170 = vmatprep.subr.mxu0 0.0
        %2171 = vmatpush1.msra.mxu0 %v2150
        %2172 = vmatprep.subr.mxu0 0.0
        %2173 = vmatpush1.msra.mxu0 %v2151
        %2174 = vmatprep.subr.mxu0 0.0
        %2175 = vmatpush1.msra.mxu0 %v2152
        %2176 = vmatprep.subr.mxu0 0.0
        %2177 = vmatpush1.msra.mxu0 %v2153
        %2178 = vmatprep.subr.mxu0 0.0
        %2179 = vmatpush1.msra.mxu0 %v2154
        %2180 = vmatprep.subr.mxu0 0.0
        %2181 = vmatpush1.msra.mxu0 %v2155
        %2182 = vmatprep.subr.mxu0 0.0
        %2183 = vmatpush1.msra.mxu0 %v2156
        %2184 = vmatprep.subr.mxu0 0.0
        %2185 = vmatpush1.msra.mxu0 %v2157
        %2186 = vmatprep.subr.mxu0 0.0
        %2187 = vmatpush1.msra.mxu0 %v2158
        %2188 = vmatprep.subr.mxu0 0.0
        %2189 = vmatpush1.msra.mxu0 %v2159
        %2190 = vmatprep.subr.mxu0 0.0
        %2191 = vmatpush1.msra.mxu0 %v2160
        %2192 = vmatprep.subr.mxu0 0.0
        %2193 = vmatpush1.msra.mxu0 %v2161
        %2194 = vmatprep.subr.mxu0 0.0
        %2195 = vmatpush1.msra.mxu0 0.0
        %2196 = vmatprep.subr.mxu0 0.0
        %2197 = vmatpush1.msra.mxu0 0.0
        %2198 = vmatprep.subr.mxu0 0.0
        %2199 = vmatpush1.msra.mxu0 0.0
        %2200 = vmatprep.subr.mxu0 0.0
        %2201 = vmatpush1.msra.mxu0 0.0
        %2202 = vmatprep.subr.mxu0 0.0
        %2203 = vmatpush1.msra.mxu0 0.0
        %2204 = vmatprep.subr.mxu0 0.0
        %2205 = vmatpush1.msra.mxu0 0.0
        %2206 = vmatprep.subr.mxu0 0.0
        %2207 = vmatpush1.msra.mxu0 0.0
        %2208 = vmatprep.subr.mxu0 0.0
        %2209 = vmatpush1.msra.mxu0 0.0
        %2210 = vmatprep.subr.mxu0 0.0
        %2211 = vmatpush1.msra.mxu0 0.0
        %2212 = vmatprep.subr.mxu0 0.0
        %2213 = vmatpush1.msra.mxu0 0.0
        %2214 = vmatprep.subr.mxu0 0.0
        %2215 = vmatpush1.msra.mxu0 0.0
        %2216 = vmatprep.subr.mxu0 0.0
        %2217 = vmatpush1.msra.mxu0 0.0
        %2218 = vmatprep.subr.mxu0 0.0
        %2219 = vmatpush1.msra.mxu0 0.0
        %2220 = vmatprep.subr.mxu0 0.0
        %2221 = vmatpush1.msra.mxu0 0.0
        %2222 = vmatprep.subr.mxu0 0.0
        %2223 = vmatpush1.msra.mxu0 0.0
        %2224 = vmatprep.subr.mxu0 0.0
        %2225 = vmatpush1.msra.mxu0 0.0
        %2226 = vmatprep.mubr.f32.mxu0 0.0
        %2227 = vmatmul.mubr.f32.gmra.mrb[0].mxu0 %v1542
        %v2228 = vpop.f32.mrb[0].mxu0
        %v2229 = vadd.f32 0.0, %v2228
        %v2230 = vpop.f32.mrb[0].mxu0
        %2231 = vmatprep.mubr.f32.mxu0 0.0
        %2232 = vmatmul.mubr.f32.gmra.mrb[0].mxu0 %v1543
        %v2233 = vpop.f32.mrb[0].mxu0
        %v2234 = vadd.f32 0.0, %v2233
        %v2235 = vpop.f32.mrb[0].mxu0
        %2236 = vmatprep.mubr.f32.mxu0 0.0
        %2237 = vmatmul.mubr.f32.gmra.mrb[0].mxu0 %v1544
        %v2238 = vpop.f32.mrb[0].mxu0
        %v2239 = vadd.f32 0.0, %v2238
        %v2240 = vpop.f32.mrb[0].mxu0
        %2241 = vmatprep.mubr.f32.mxu0 0.0
        %2242 = vmatmul.mubr.f32.gmra.mrb[0].mxu0 %v1545
        %v2243 = vpop.f32.mrb[0].mxu0
        %v2244 = vadd.f32 0.0, %v2243
        %v2245 = vpop.f32.mrb[0].mxu0
        %2246 = vmatprep.mubr.f32.mxu0 0.0
        %2247 = vmatmul.mubr.f32.gmra.mrb[0].mxu0 %v1546
        %v2248 = vpop.f32.mrb[0].mxu0
        %v2249 = vadd.f32 0.0, %v2248
        %v2250 = vpop.f32.mrb[0].mxu0
        %2251 = vmatprep.mubr.f32.mxu0 0.0
        %2252 = vmatmul.mubr.f32.gmra.mrb[0].mxu0 %v1547
        %v2253 = vpop.f32.mrb[0].mxu0
        %v2254 = vadd.f32 0.0, %v2253
        %v2255 = vpop.f32.mrb[0].mxu0
        %2256 = vmatprep.mubr.f32.mxu0 0.0
        %2257 = vmatmul.mubr.f32.gmra.mrb[0].mxu0 %v1548
        %v2258 = vpop.f32.mrb[0].mxu0
        %v2259 = vadd.f32 0.0, %v2258
        %v2260 = vpop.f32.mrb[0].mxu0
        %2261 = vmatprep.mubr.f32.mxu0 0.0
        %2262 = vmatmul.mubr.f32.gmra.mrb[0].mxu0 %v1549
        %v2263 = vpop.f32.mrb[0].mxu0
        %v2264 = vadd.f32 0.0, %v2263
        %v2265 = vpop.f32.mrb[0].mxu0
        %2266 = vmatprep.mubr.f32.mxu0 0.0
        %2267 = vmatmul.mubr.f32.gmra.mrb[0].mxu0 %v1550
        %v2268 = vpop.f32.mrb[0].mxu0
        %v2269 = vadd.f32 0.0, %v2268
        %v2270 = vpop.f32.mrb[0].mxu0
        %2271 = vmatprep.mubr.f32.mxu0 0.0
        %2272 = vmatmul.mubr.f32.gmra.mrb[0].mxu0 %v1551
        %v2273 = vpop.f32.mrb[0].mxu0
        %v2274 = vadd.f32 0.0, %v2273
        %v2275 = vpop.f32.mrb[0].mxu0
        %2276 = vmatprep.mubr.f32.mxu0 0.0
        %2277 = vmatmul.mubr.f32.gmra.mrb[0].mxu0 %v1552
        %v2278 = vpop.f32.mrb[0].mxu0
        %v2279 = vadd.f32 0.0, %v2278
        %v2280 = vpop.f32.mrb[0].mxu0
        %2281 = vmatprep.mubr.f32.mxu0 0.0
        %2282 = vmatmul.mubr.f32.gmra.mrb[0].mxu0 %v1553
        %v2283 = vpop.f32.mrb[0].mxu0
        %v2284 = vadd.f32 0.0, %v2283
        %v2285 = vpop.f32.mrb[0].mxu0
        %2286 = vdwg.mxu0
        %v2287 = vadd.f32 %v2133, %v2229
        %v2288 = vadd.f32 %v2134, %v2234
        %v2289 = vadd.f32 %v2135, %v2239
        %v2290 = vadd.f32 %v2136, %v2244
        %v2291 = vadd.f32 %v2137, %v2249
        %v2292 = vadd.f32 %v2138, %v2254
        %v2293 = vadd.f32 %v2139, %v2259
        %v2294 = vadd.f32 %v2140, %v2264
        %v2295 = vadd.f32 %v2141, %v2269
        %v2296 = vadd.f32 %v2142, %v2274
        %v2297 = vadd.f32 %v2143, %v2279
        %v2298 = vadd.f32 %v2144, %v2284
        %v2299 = vld [vmem:[%s3] sm:$0x1]
        %v2301 = vlaneseq
        %v2302 = vshrl.u32 %v2301, 7
        %v2303 = vsub.s32 0, %v2302
        %v2304 = vrot.slane %v2299, %v2303
        %v2306 = vadd.f32 %v2287, %v2304
        %v2307 = vadd.f32 %v2288, %v2304
        %v2308 = vadd.f32 %v2289, %v2304
        %v2309 = vadd.f32 %v2290, %v2304
        %v2310 = vadd.f32 %v2291, %v2304
        %v2311 = vadd.f32 %v2292, %v2304
        %v2312 = vadd.f32 %v2293, %v2304
        %v2313 = vadd.f32 %v2294, %v2304
        %v2314 = vadd.f32 %v2295, %v2304
        %v2315 = vadd.f32 %v2296, %v2304
        %v2316 = vadd.f32 %v2297, %v2304
        %v2317 = vadd.f32 %v2298, %v2304
        %v2318 = vmax.f32 %v2306, 0.0
        %v2319 = vmax.f32 %v2307, 0.0
        %v2320 = vmax.f32 %v2308, 0.0
        %v2321 = vmax.f32 %v2309, 0.0
        %v2322 = vmax.f32 %v2310, 0.0
        %v2323 = vmax.f32 %v2311, 0.0
        %v2324 = vmax.f32 %v2312, 0.0
        %v2325 = vmax.f32 %v2313, 0.0
        %v2326 = vmax.f32 %v2314, 0.0
        %v2327 = vmax.f32 %v2315, 0.0
        %v2328 = vmax.f32 %v2316, 0.0
        %v2329 = vmax.f32 %v2317, 0.0
        %v2330 = vadd.f32 %v2318, %v2319
        %v2331 = vadd.f32 %v2330, %v2320
        %v2332 = vadd.f32 %v2331, %v2321
        %v2333 = vadd.f32 %v2332, %v2322
        %v2334 = vadd.f32 %v2333, %v2323
        %v2335 = vadd.f32 %v2334, %v2324
        %v2336 = vadd.f32 %v2335, %v2325
        %v2337 = vadd.f32 %v2336, %v2326
        %v2338 = vadd.f32 %v2337, %v2327
        %v2339 = vadd.f32 %v2338, %v2328
        %v2340 = vadd.f32 %v2339, %v2329
        %v2341 = vld [vmem:[%s4] sm:$0xff]
        %v2342 = vld [vmem:[%s4 + $0x8] sm:$0xff]
        %v2343 = vld [vmem:[%s4 + $0x10] sm:$0xff]
        %v2344 = vld [vmem:[%s4 + $0x18] sm:$0xff]
        %v2345 = vld [vmem:[%s4 + $0x20] sm:$0xff]
        %v2346 = vld [vmem:[%s4 + $0x28] sm:$0xff]
        %v2347 = vld [vmem:[%s5] sm:$0x1]
        %v2349 = vlaneseq
        %v2350 = vshrl.u32 %v2349, 7
        %v2351 = vsub.s32 0, %v2350
        %v2352 = vrot.slane %v2347, %v2351
        %vm2354 = vcmask 392192
        %v2356 = vsel %vm2354, %v2340, 0
        %2358 = vmatprep.subr.mxu0 0.0
        %2359 = vmatpush1.msra.mxu0 %v2341
        %2360 = vmatprep.subr.mxu0 0.0
        %2361 = vmatpush1.msra.mxu0 %v2342
        %2362 = vmatprep.subr.mxu0 0.0
        %2363 = vmatpush1.msra.mxu0 %v2343
        %2364 = vmatprep.subr.mxu0 0.0
        %2365 = vmatpush1.msra.mxu0 %v2344
        %2366 = vmatprep.subr.mxu0 0.0
        %2367 = vmatpush1.msra.mxu0 %v2345
        %2368 = vmatprep.subr.mxu0 0.0
        %2369 = vmatpush1.msra.mxu0 %v2346
        %2370 = vmatprep.subr.mxu0 0.0
        %2371 = vmatpush1.msra.mxu0 0.0
        %2372 = vmatprep.subr.mxu0 0.0
        %2373 = vmatpush1.msra.mxu0 0.0
        %2374 = vmatprep.subr.mxu0 0.0
        %2375 = vmatpush1.msra.mxu0 0.0
        %2376 = vmatprep.subr.mxu0 0.0
        %2377 = vmatpush1.msra.mxu0 0.0
        %2378 = vmatprep.subr.mxu0 0.0
        %2379 = vmatpush1.msra.mxu0 0.0
        %2380 = vmatprep.subr.mxu0 0.0
        %2381 = vmatpush1.msra.mxu0 0.0
        %2382 = vmatprep.subr.mxu0 0.0
        %2383 = vmatpush1.msra.mxu0 0.0
        %2384 = vmatprep.subr.mxu0 0.0
        %2385 = vmatpush1.msra.mxu0 0.0
        %2386 = vmatprep.subr.mxu0 0.0
        %2387 = vmatpush1.msra.mxu0 0.0
        %2388 = vmatprep.subr.mxu0 0.0
        %2389 = vmatpush1.msra.mxu0 0.0
        %2390 = vmatprep.subr.mxu0 0.0
        %2391 = vmatpush1.msra.mxu0 0.0
        %2392 = vmatprep.subr.mxu0 0.0
        %2393 = vmatpush1.msra.mxu0 0.0
        %2394 = vmatprep.subr.mxu0 0.0
        %2395 = vmatpush1.msra.mxu0 0.0
        %2396 = vmatprep.subr.mxu0 0.0
        %2397 = vmatpush1.msra.mxu0 0.0
        %2398 = vmatprep.subr.mxu0 0.0
        %2399 = vmatpush1.msra.mxu0 0.0
        %2400 = vmatprep.subr.mxu0 0.0
        %2401 = vmatpush1.msra.mxu0 0.0
        %2402 = vmatprep.subr.mxu0 0.0
        %2403 = vmatpush1.msra.mxu0 0.0
        %2404 = vmatprep.subr.mxu0 0.0
        %2405 = vmatpush1.msra.mxu0 0.0
        %2406 = vmatprep.subr.mxu0 0.0
        %2407 = vmatpush1.msra.mxu0 0.0
        %2408 = vmatprep.subr.mxu0 0.0
        %2409 = vmatpush1.msra.mxu0 0.0
        %2410 = vmatprep.subr.mxu0 0.0
        %2411 = vmatpush1.msra.mxu0 0.0
        %2412 = vmatprep.subr.mxu0 0.0
        %2413 = vmatpush1.msra.mxu0 0.0
        %2414 = vmatprep.subr.mxu0 0.0
        %2415 = vmatpush1.msra.mxu0 0.0
        %2416 = vmatprep.subr.mxu0 0.0
        %2417 = vmatpush1.msra.mxu0 0.0
        %2418 = vmatprep.subr.mxu0 0.0
        %2419 = vmatpush1.msra.mxu0 0.0
        %2420 = vmatprep.subr.mxu0 0.0
        %2421 = vmatpush1.msra.mxu0 0.0
        %2422 = vmatprep.mubr.f32.mxu0 0.0
        %2423 = vmatmul.mubr.f32.gmra.mrb[0].mxu0 %v2356
        %v2424 = vpop.f32.mrb[0].mxu0
        %v2425 = vadd.f32 %v2352, %v2424
        %v2426 = vpop.f32.mrb[0].mxu0
        %2427 = vdwg.mxu0
        %2428 = vst [vmem:[%s259] sm:$0xff] %v2425
        %s2429 = sand.u32 %s160, 1
        %s2430 = scalar_lea.sflag [#allocation4], %s2429
        %s2431 = sand.u32 %s160, 1
        %s2432 = smul.addr %s2431, 8
        %s2433 = scalar_lea.vmem [#allocation5], %s2432
        // Predicated region
        $region49: #{tpu_custom_call.1} parent=43 // pred_check
          %p2434 = pneg %p170
        $region50: #{tpu_custom_call.1} parent=43 // pred_check_branch
          %2436 = sbr.rel (%p2434) target = $region52
        $region51: #{tpu_custom_call.1} parent=43 // pred_region
          %s2438 = ssub.s32 128, 128
          %2439 = vsyncadd %s2430, %s2438
          %s2440 = smul.addr %s21, 128
          %s2441 = scalar_lea.hbm %s6, %s2440
          %s2443 = sshll.u32 %s2433, 4
          %s2444 = int_to_ptr.vmem [resolvable:$true] %s2443
          %2446 = dma.vmem_to_hbm [thread:$0]  %s2444, 128, %s2441, %s2430
        $region52: #{tpu_custom_call.1} parent=43 // pred_fallthru
          _
      $region44: #{tpu_custom_call.1} parent=5 // pred_fallthru
        _
      %p2447 = scmp.le.s32.totalorder 2, %s16
      // Predicated region
      $region53: #{tpu_custom_call.1} parent=5 // pred_check
        %p2448 = pneg %p2447
      $region54: #{tpu_custom_call.1} parent=5 // pred_check_branch
        %2450 = sbr.rel (%p2448) target = $region56
      $region55: #{tpu_custom_call.1} parent=5 // pred_region
        %s2451 = ssub.s32 %s16, 2
        // Predicated region
        $region57: #{tpu_custom_call.1} parent=55 // pred_check
          %p2452 = pneg %p176
        $region58: #{tpu_custom_call.1} parent=55 // pred_check_branch
          %2454 = sbr.rel (%p2452) target = $region60
        $region59: #{tpu_custom_call.1} parent=55 // pred_region
          %s2455 = sand.u32 %s161, 1
          %s2456 = scalar_lea.sflag [#allocation4], %s2455
          %s2457 = sand.u32 %s161, 1
          %s2458 = smul.addr %s2457, 8
          %s2459 = scalar_lea.vmem [#allocation5], %s2458
          %2460 = dma.done %s2456, 128
        $region60: #{tpu_custom_call.1} parent=55 // pred_fallthru
          _
      $region56: #{tpu_custom_call.1} parent=5 // pred_fallthru
        _
    $region6: #{tpu_custom_call.1} parent=1 // loop_footer
      %s20 = sadd.s32 1, %s16
    $region7: #{tpu_custom_call.1} parent=1 // loop_footer_branch
      %15 = sbr.rel target = $region3
    $region8: #{tpu_custom_call.1} parent=1 // loop_exit
      _
    %2461 = vsyncpa [#allocation3], 1
    %s2462 = scalar_lea.sflag [#allocation3], 1
    %2463 = vsyncpa %s2462, 1
    %2464 = vsyncpa [#allocation4], 1
    %s2465 = scalar_lea.sflag [#allocation4], 1
    %2466 = vsyncpa %s2465, 1

</llo_original>
